<compile_context>
chip_gen: v7x
topology: tpu7x:2x2x1
jax: 0.10.0
libtpu: 0.0.40
codegen_flags: <defaults>
</compile_context>

<pallas_src>
import functools

import jax
import jax.numpy as jnp
from jax.experimental import pallas as pl
from jax.experimental.pallas import tpu as pltpu


IN_DIM = 768
ENC_DIM = 12          # true bottleneck width
ENC_PAD = 128         # lane-dense padded bottleneck width

# (in_features, out_features) for the 12 Linear layers, in forward order (PyTorch module).
LAYER_DIMS = [
    (768, 256), (256, 128), (128, 64),      # encoder_layer1 (ReLU after each)
    (64, 32), (32, 24), (24, 12),           # encoder_layer2 (ReLU, ReLU, none)
    (12, 24), (24, 32), (32, 64),           # decoder_layer1 (ReLU after each)
    (64, 128), (128, 256), (256, 768),      # decoder_layer2 (ReLU, ReLU, Tanh)
]

# Output widths as seen INSIDE the kernel (layer 5 padded 12 -> 128 for lane-dense stores).
_KERNEL_OUT_DIMS = [256, 128, 64, 32, 24, ENC_PAD, 24, 32, 64, 128, 256, 768]
_ACTS = (["relu"] * 5) + [None] + (["relu"] * 5) + ["tanh"]


def _ae_kernel(x_ref, *rest):
    w_refs = rest[:12]          # bf16 weights, (in, out) layout -> h @ W
    b_ref = rest[12]            # (12, 768) f32, zero-padded bias table (VMEM ref)
    enc_ref = rest[13]          # (tile, 128) output
    dec_ref = rest[14]          # (tile, 768) output

    h = x_ref[...].astype(jnp.float32)

    for li in range(12):
        n_out = _KERNEL_OUT_DIMS[li]
        # bf16 operands -> native MXU path; accumulate in f32.
        y = jnp.dot(h.astype(jnp.bfloat16), w_refs[li][...],
                    preferred_element_type=jnp.float32)
        # Per-layer bias slice straight from the ref: tiny load, short live range.
        y = y + b_ref[li:li + 1, :n_out]
        act = _ACTS[li]
        if act == "relu":
            h = jnp.maximum(y, 0.0)
        elif act == "tanh":
            h = jnp.tanh(y)
        else:
            h = y
        if li == 5:
            # Bottleneck (no activation). Lanes 12..127 are exactly zero by construction.
            enc_ref[...] = h.astype(enc_ref.dtype)

    dec_ref[...] = h.astype(dec_ref.dtype)


def init_params(key):
    """Deterministic PyTorch-default-style init: U(-1/sqrt(fan_in), 1/sqrt(fan_in))."""
    ws, bs = [], []
    for i, (fan_in, fan_out) in enumerate(LAYER_DIMS):
        kw, kb = jax.random.split(jax.random.fold_in(key, i))
        bound = 1.0 / jnp.sqrt(fan_in)
        ws.append(jax.random.uniform(kw, (fan_in, fan_out), jnp.float32, -bound, bound))
        bs.append(jax.random.uniform(kb, (fan_out,), jnp.float32, -bound, bound))
    return ws, bs


def _round_up(n, m):
    return (n + m - 1) // m * m


def _cdiv(a, b):
    return -(-a // b)


@functools.partial(jax.jit, static_argnames=("max_tile_rows", "out_dtype"))
def autoencoder_forward(x, ws, bs, *, max_tile_rows=1024, out_dtype=jnp.bfloat16):
    """x: (..., 768) float32. Returns (encoded (..., 12), decoded (..., 768)) in out_dtype."""
    lead_shape = x.shape[:-1]
    x2 = x.reshape(-1, IN_DIM).astype(jnp.float32)
    n_rows = x2.shape[0]

    # --- Row tile / grid policy ---
    # * pad only to a multiple of 8 rows worth per tile (never ~2x the batch),
    # * tile <= max_tile_rows (default 1024; ~22 MiB VMEM total, fits every generation),
    # * >= 2 and an even number of grid steps whenever possible so both v7x TCs get work.
    rows8 = _round_up(max(n_rows, 1), 8)
    max_tile = max(8, _round_up(min(max_tile_rows, rows8), 8))
    num_tiles = _cdiv(rows8, max_tile)
    if rows8 > 8:
        num_tiles = max(num_tiles, 2)
    if num_tiles > 1 and num_tiles % 2:
        num_tiles += 1
    tile = _round_up(_cdiv(rows8, num_tiles), 8)
    rows_p = tile * num_tiles
    if rows_p != n_rows:
        x2 = jnp.pad(x2, ((0, rows_p - n_rows), (0, 0)))

    # --- Prepare kernel-side parameters ---
    # bf16 weights; pad bottleneck layer (24,12)->(24,128) and following layer (12,24)->(128,24)
    # with zeros so the encoded activation / store is lane-dense (numerically exact).
    w_k = [w.astype(jnp.bfloat16) for w in ws]
    w_k[5] = jnp.pad(ws[5], ((0, 0), (0, ENC_PAD - ENC_DIM))).astype(jnp.bfloat16)
    w_k[6] = jnp.pad(ws[6], ((0, ENC_PAD - ENC_DIM), (0, 0))).astype(jnp.bfloat16)

    # Pack the 12 biases into one zero-padded (12, 768) f32 table (one constant block).
    b_mat = jnp.zeros((12, IN_DIM), jnp.float32)
    for i, b in enumerate(bs):
        b_mat = b_mat.at[i, : b.shape[-1]].set(b.reshape(-1))

    in_specs = [pl.BlockSpec((tile, IN_DIM), lambda i: (i, 0))]
    for w in w_k:
        in_specs.append(pl.BlockSpec(w.shape, lambda i: (0, 0)))   # resident constant block
    in_specs.append(pl.BlockSpec(b_mat.shape, lambda i: (0, 0)))    # resident constant block

    out_specs = [
        pl.BlockSpec((tile, ENC_PAD), lambda i: (i, 0)),
        pl.BlockSpec((tile, IN_DIM), lambda i: (i, 0)),
    ]
    out_shape = [
        jax.ShapeDtypeStruct((rows_p, ENC_PAD), out_dtype),
        jax.ShapeDtypeStruct((rows_p, IN_DIM), out_dtype),
    ]

    enc_p, dec_p = pl.pallas_call(
        _ae_kernel,
        grid=(num_tiles,),
        in_specs=in_specs,
        out_specs=out_specs,
        out_shape=out_shape,
        compiler_params=pltpu.CompilerParams(
            dimension_semantics=("parallel",),
            # ~22 MiB needed at tile=1024; 48 MiB keeps 16 MiB headroom on v7x (64 MiB/TC).
            vmem_limit_bytes=48 * 1024 * 1024,
        ),
    )(x2, *w_k, b_mat)

    enc = enc_p[:n_rows, :ENC_DIM].reshape(lead_shape + (ENC_DIM,))
    dec = dec_p[:n_rows, :].reshape(lead_shape + (IN_DIM,))
    return enc, dec


def _reference_forward(x, ws, bs):
    """Pure-JAX f32 reference mirroring the PyTorch module."""
    h = x.reshape(-1, IN_DIM)
    enc = None
    for i, (w, b, a) in enumerate(zip(ws, bs, _ACTS)):
        h = h @ w + b
        if a == "relu":
            h = jax.nn.relu(h)
        elif a == "tanh":
            h = jnp.tanh(h)
        if i == 5:
            enc = h
    return enc.reshape(x.shape[:-1] + (ENC_DIM,)), h.reshape(x.shape)


if __name__ == "__main__":
    key = jax.random.PRNGKey(0)
    k_x, k_p = jax.random.split(key)

    batch, seq = 2, 8
    x = jax.random.normal(k_x, (batch, seq, IN_DIM), jnp.float32)

    ws, bs = init_params(k_p)
    enc_ref, dec_ref = _reference_forward(x, ws, bs)

    # Default (bf16-output) path.
    enc, dec = autoencoder_forward(x, ws, bs)
    jax.block_until_ready((enc, dec))
    assert enc.shape == (batch, seq, ENC_DIM), enc.shape
    assert dec.shape == (batch, seq, IN_DIM), dec.shape
    # bf16 MXU path + bf16 stores vs f32 reference.
    assert jnp.allclose(enc.astype(jnp.float32), enc_ref, rtol=2e-2, atol=2e-2)
    assert jnp.allclose(dec.astype(jnp.float32), dec_ref, rtol=2e-2, atol=2e-2)

    # f32-output path (exact dtype parity with the PyTorch module).
    enc32, dec32 = autoencoder_forward(x, ws, bs, out_dtype=jnp.float32)
    jax.block_until_ready((enc32, dec32))
    assert jnp.allclose(enc32, enc_ref, rtol=1e-2, atol=1e-2)
    assert jnp.allclose(dec32, dec_ref, rtol=1e-2, atol=1e-2)

    print("KERNEL_OK")
</pallas_src>

<mosaic_0001>
module attributes {stable_mosaic.version = 11 : i64} {
  func.func @_ae_kernel(%arg0: i32, %arg1: memref<8x768xf32, #tpu.memory_space<vmem>>, %arg2: memref<768x256xbf16, #tpu.memory_space<vmem>>, %arg3: memref<256x128xbf16, #tpu.memory_space<vmem>>, %arg4: memref<128x64xbf16, #tpu.memory_space<vmem>>, %arg5: memref<64x32xbf16, #tpu.memory_space<vmem>>, %arg6: memref<32x24xbf16, #tpu.memory_space<vmem>>, %arg7: memref<24x128xbf16, #tpu.memory_space<vmem>>, %arg8: memref<128x24xbf16, #tpu.memory_space<vmem>>, %arg9: memref<24x32xbf16, #tpu.memory_space<vmem>>, %arg10: memref<32x64xbf16, #tpu.memory_space<vmem>>, %arg11: memref<64x128xbf16, #tpu.memory_space<vmem>>, %arg12: memref<128x256xbf16, #tpu.memory_space<vmem>>, %arg13: memref<256x768xbf16, #tpu.memory_space<vmem>>, %arg14: memref<12x768xf32, #tpu.memory_space<vmem>>, %arg15: memref<8x128xbf16, #tpu.memory_space<vmem>>, %arg16: memref<8x768xbf16, #tpu.memory_space<vmem>>) attributes {dimension_semantics = [#tpu.dimension_semantics<parallel>], iteration_bounds = array<i64: 2>, scalar_prefetch = 0 : i64, scratch_operands = 0 : i64, tpu.core_type = #tpu.core_type<tc>, window_params = [{transform_indices = @transform_0, window_bounds = array<i64: 8, 768>}, {pipeline_mode = #tpu.pipeline_mode<synchronous>, transform_indices = @transform_1, window_bounds = array<i64: 768, 256>}, {pipeline_mode = #tpu.pipeline_mode<synchronous>, transform_indices = @transform_2, window_bounds = array<i64: 256, 128>}, {pipeline_mode = #tpu.pipeline_mode<synchronous>, transform_indices = @transform_3, window_bounds = array<i64: 128, 64>}, {pipeline_mode = #tpu.pipeline_mode<synchronous>, transform_indices = @transform_4, window_bounds = array<i64: 64, 32>}, {pipeline_mode = #tpu.pipeline_mode<synchronous>, transform_indices = @transform_5, window_bounds = array<i64: 32, 24>}, {pipeline_mode = #tpu.pipeline_mode<synchronous>, transform_indices = @transform_6, window_bounds = array<i64: 24, 128>}, {pipeline_mode = #tpu.pipeline_mode<synchronous>, transform_indices = @transform_7, window_bounds = array<i64: 128, 24>}, {pipeline_mode = #tpu.pipeline_mode<synchronous>, transform_indices = @transform_8, window_bounds = array<i64: 24, 32>}, {pipeline_mode = #tpu.pipeline_mode<synchronous>, transform_indices = @transform_9, window_bounds = array<i64: 32, 64>}, {pipeline_mode = #tpu.pipeline_mode<synchronous>, transform_indices = @transform_10, window_bounds = array<i64: 64, 128>}, {pipeline_mode = #tpu.pipeline_mode<synchronous>, transform_indices = @transform_11, window_bounds = array<i64: 128, 256>}, {pipeline_mode = #tpu.pipeline_mode<synchronous>, transform_indices = @transform_12, window_bounds = array<i64: 256, 768>}, {pipeline_mode = #tpu.pipeline_mode<synchronous>, transform_indices = @transform_13, window_bounds = array<i64: 12, 768>}, {transform_indices = @transform_14, window_bounds = array<i64: 8, 128>}, {transform_indices = @transform_15, window_bounds = array<i64: 8, 768>}]} {
    %c0 = arith.constant 0 : index
    %c0_0 = arith.constant 0 : index
    %0 = vector.load %arg1[%c0, %c0_0] : memref<8x768xf32, #tpu.memory_space<vmem>>, vector<8x768xf32>
    %1 = arith.truncf %0 : vector<8x768xf32> to vector<8x768xbf16>
    %c0_1 = arith.constant 0 : index
    %c0_2 = arith.constant 0 : index
    %2 = vector.load %arg2[%c0_1, %c0_2] : memref<768x256xbf16, #tpu.memory_space<vmem>>, vector<768x256xbf16>
    %cst = arith.constant dense<0.000000e+00> : vector<8x256xf32>
    %3 = tpu.matmul %1, %2, %cst {dimension_numbers = #tpu.dot_dimension_numbers<[1], [0], [0], [1], [0, 0, 1, 1], [], []>} : vector<8x768xbf16>, vector<768x256xbf16>, vector<8x256xf32> -> vector<8x256xf32>
    %c0_3 = arith.constant 0 : index
    %c0_4 = arith.constant 0 : index
    %4 = vector.load %arg14[%c0_3, %c0_4] : memref<12x768xf32, #tpu.memory_space<vmem>>, vector<1x256xf32>
    %5 = vector.broadcast %4 : vector<1x256xf32> to vector<8x256xf32>
    %6 = arith.addf %3, %5 : vector<8x256xf32>
    %cst_5 = arith.constant 0.000000e+00 : f32
    %7 = vector.broadcast %cst_5 : f32 to vector<8x256xf32>
    %8 = arith.maximumf %6, %7 : vector<8x256xf32>
    %9 = arith.truncf %8 : vector<8x256xf32> to vector<8x256xbf16>
    %c0_6 = arith.constant 0 : index
    %c0_7 = arith.constant 0 : index
    %10 = vector.load %arg3[%c0_6, %c0_7] : memref<256x128xbf16, #tpu.memory_space<vmem>>, vector<256x128xbf16>
    %cst_8 = arith.constant dense<0.000000e+00> : vector<8x128xf32>
    %11 = tpu.matmul %9, %10, %cst_8 {dimension_numbers = #tpu.dot_dimension_numbers<[1], [0], [0], [1], [0, 0, 1, 1], [], []>} : vector<8x256xbf16>, vector<256x128xbf16>, vector<8x128xf32> -> vector<8x128xf32>
    %c1 = arith.constant 1 : index
    %c0_9 = arith.constant 0 : index
    %12 = vector.load %arg14[%c1, %c0_9] : memref<12x768xf32, #tpu.memory_space<vmem>>, vector<1x128xf32>
    %13 = vector.broadcast %12 : vector<1x128xf32> to vector<8x128xf32>
    %14 = arith.addf %11, %13 : vector<8x128xf32>
    %cst_10 = arith.constant 0.000000e+00 : f32
    %15 = vector.broadcast %cst_10 : f32 to vector<8x128xf32>
    %16 = arith.maximumf %14, %15 : vector<8x128xf32>
    %17 = arith.truncf %16 : vector<8x128xf32> to vector<8x128xbf16>
    %c0_11 = arith.constant 0 : index
    %c0_12 = arith.constant 0 : index
    %18 = vector.load %arg4[%c0_11, %c0_12] : memref<128x64xbf16, #tpu.memory_space<vmem>>, vector<128x64xbf16>
    %cst_13 = arith.constant dense<0.000000e+00> : vector<8x64xf32>
    %19 = tpu.matmul %17, %18, %cst_13 {dimension_numbers = #tpu.dot_dimension_numbers<[1], [0], [0], [1], [0, 0, 1, 1], [], []>} : vector<8x128xbf16>, vector<128x64xbf16>, vector<8x64xf32> -> vector<8x64xf32>
    %c2 = arith.constant 2 : index
    %c0_14 = arith.constant 0 : index
    %20 = vector.load %arg14[%c2, %c0_14] : memref<12x768xf32, #tpu.memory_space<vmem>>, vector<1x64xf32>
    %21 = vector.broadcast %20 : vector<1x64xf32> to vector<8x64xf32>
    %22 = arith.addf %19, %21 : vector<8x64xf32>
    %cst_15 = arith.constant 0.000000e+00 : f32
    %23 = vector.broadcast %cst_15 : f32 to vector<8x64xf32>
    %24 = arith.maximumf %22, %23 : vector<8x64xf32>
    %25 = arith.truncf %24 : vector<8x64xf32> to vector<8x64xbf16>
    %c0_16 = arith.constant 0 : index
    %c0_17 = arith.constant 0 : index
    %26 = vector.load %arg5[%c0_16, %c0_17] : memref<64x32xbf16, #tpu.memory_space<vmem>>, vector<64x32xbf16>
    %cst_18 = arith.constant dense<0.000000e+00> : vector<8x32xf32>
    %27 = tpu.matmul %25, %26, %cst_18 {dimension_numbers = #tpu.dot_dimension_numbers<[1], [0], [0], [1], [0, 0, 1, 1], [], []>} : vector<8x64xbf16>, vector<64x32xbf16>, vector<8x32xf32> -> vector<8x32xf32>
    %c3 = arith.constant 3 : index
    %c0_19 = arith.constant 0 : index
    %28 = vector.load %arg14[%c3, %c0_19] : memref<12x768xf32, #tpu.memory_space<vmem>>, vector<1x32xf32>
    %29 = vector.broadcast %28 : vector<1x32xf32> to vector<8x32xf32>
    %30 = arith.addf %27, %29 : vector<8x32xf32>
    %cst_20 = arith.constant 0.000000e+00 : f32
    %31 = vector.broadcast %cst_20 : f32 to vector<8x32xf32>
    %32 = arith.maximumf %30, %31 : vector<8x32xf32>
    %33 = arith.truncf %32 : vector<8x32xf32> to vector<8x32xbf16>
    %c0_21 = arith.constant 0 : index
    %c0_22 = arith.constant 0 : index
    %34 = vector.load %arg6[%c0_21, %c0_22] : memref<32x24xbf16, #tpu.memory_space<vmem>>, vector<32x24xbf16>
    %cst_23 = arith.constant dense<0.000000e+00> : vector<8x24xf32>
    %35 = tpu.matmul %33, %34, %cst_23 {dimension_numbers = #tpu.dot_dimension_numbers<[1], [0], [0], [1], [0, 0, 1, 1], [], []>} : vector<8x32xbf16>, vector<32x24xbf16>, vector<8x24xf32> -> vector<8x24xf32>
    %c4 = arith.constant 4 : index
    %c0_24 = arith.constant 0 : index
    %36 = vector.load %arg14[%c4, %c0_24] : memref<12x768xf32, #tpu.memory_space<vmem>>, vector<1x24xf32>
    %37 = vector.broadcast %36 : vector<1x24xf32> to vector<8x24xf32>
    %38 = arith.addf %35, %37 : vector<8x24xf32>
    %cst_25 = arith.constant 0.000000e+00 : f32
    %39 = vector.broadcast %cst_25 : f32 to vector<8x24xf32>
    %40 = arith.maximumf %38, %39 : vector<8x24xf32>
    %41 = arith.truncf %40 : vector<8x24xf32> to vector<8x24xbf16>
    %c0_26 = arith.constant 0 : index
    %c0_27 = arith.constant 0 : index
    %42 = vector.load %arg7[%c0_26, %c0_27] : memref<24x128xbf16, #tpu.memory_space<vmem>>, vector<24x128xbf16>
    %cst_28 = arith.constant dense<0.000000e+00> : vector<8x128xf32>
    %43 = tpu.matmul %41, %42, %cst_28 {dimension_numbers = #tpu.dot_dimension_numbers<[1], [0], [0], [1], [0, 0, 1, 1], [], []>} : vector<8x24xbf16>, vector<24x128xbf16>, vector<8x128xf32> -> vector<8x128xf32>
    %c5 = arith.constant 5 : index
    %c0_29 = arith.constant 0 : index
    %44 = vector.load %arg14[%c5, %c0_29] : memref<12x768xf32, #tpu.memory_space<vmem>>, vector<1x128xf32>
    %45 = vector.broadcast %44 : vector<1x128xf32> to vector<8x128xf32>
    %46 = arith.addf %43, %45 : vector<8x128xf32>
    %47 = arith.truncf %46 : vector<8x128xf32> to vector<8x128xbf16>
    %c0_30 = arith.constant 0 : index
    %c0_31 = arith.constant 0 : index
    %48 = vector.load %arg15[%c0_30, %c0_31] : memref<8x128xbf16, #tpu.memory_space<vmem>>, vector<8x128xbf16>
    tpu.vector_store %arg15[%c0_30, %c0_31], %47 {strides = array<i32>} : memref<8x128xbf16, #tpu.memory_space<vmem>>, vector<8x128xbf16>,
    %49 = arith.truncf %46 : vector<8x128xf32> to vector<8x128xbf16>
    %c0_32 = arith.constant 0 : index
    %c0_33 = arith.constant 0 : index
    %50 = vector.load %arg8[%c0_32, %c0_33] : memref<128x24xbf16, #tpu.memory_space<vmem>>, vector<128x24xbf16>
    %cst_34 = arith.constant dense<0.000000e+00> : vector<8x24xf32>
    %51 = tpu.matmul %49, %50, %cst_34 {dimension_numbers = #tpu.dot_dimension_numbers<[1], [0], [0], [1], [0, 0, 1, 1], [], []>} : vector<8x128xbf16>, vector<128x24xbf16>, vector<8x24xf32> -> vector<8x24xf32>
    %c6 = arith.constant 6 : index
    %c0_35 = arith.constant 0 : index
    %52 = vector.load %arg14[%c6, %c0_35] : memref<12x768xf32, #tpu.memory_space<vmem>>, vector<1x24xf32>
    %53 = vector.broadcast %52 : vector<1x24xf32> to vector<8x24xf32>
    %54 = arith.addf %51, %53 : vector<8x24xf32>
    %cst_36 = arith.constant 0.000000e+00 : f32
    %55 = vector.broadcast %cst_36 : f32 to vector<8x24xf32>
    %56 = arith.maximumf %54, %55 : vector<8x24xf32>
    %57 = arith.truncf %56 : vector<8x24xf32> to vector<8x24xbf16>
    %c0_37 = arith.constant 0 : index
    %c0_38 = arith.constant 0 : index
    %58 = vector.load %arg9[%c0_37, %c0_38] : memref<24x32xbf16, #tpu.memory_space<vmem>>, vector<24x32xbf16>
    %cst_39 = arith.constant dense<0.000000e+00> : vector<8x32xf32>
    %59 = tpu.matmul %57, %58, %cst_39 {dimension_numbers = #tpu.dot_dimension_numbers<[1], [0], [0], [1], [0, 0, 1, 1], [], []>} : vector<8x24xbf16>, vector<24x32xbf16>, vector<8x32xf32> -> vector<8x32xf32>
    %c7 = arith.constant 7 : index
    %c0_40 = arith.constant 0 : index
    %60 = vector.load %arg14[%c7, %c0_40] : memref<12x768xf32, #tpu.memory_space<vmem>>, vector<1x32xf32>
    %61 = vector.broadcast %60 : vector<1x32xf32> to vector<8x32xf32>
    %62 = arith.addf %59, %61 : vector<8x32xf32>
    %cst_41 = arith.constant 0.000000e+00 : f32
    %63 = vector.broadcast %cst_41 : f32 to vector<8x32xf32>
    %64 = arith.maximumf %62, %63 : vector<8x32xf32>
    %65 = arith.truncf %64 : vector<8x32xf32> to vector<8x32xbf16>
    %c0_42 = arith.constant 0 : index
    %c0_43 = arith.constant 0 : index
    %66 = vector.load %arg10[%c0_42, %c0_43] : memref<32x64xbf16, #tpu.memory_space<vmem>>, vector<32x64xbf16>
    %cst_44 = arith.constant dense<0.000000e+00> : vector<8x64xf32>
    %67 = tpu.matmul %65, %66, %cst_44 {dimension_numbers = #tpu.dot_dimension_numbers<[1], [0], [0], [1], [0, 0, 1, 1], [], []>} : vector<8x32xbf16>, vector<32x64xbf16>, vector<8x64xf32> -> vector<8x64xf32>
    %c8 = arith.constant 8 : index
    %c0_45 = arith.constant 0 : index
    %68 = vector.load %arg14[%c8, %c0_45] : memref<12x768xf32, #tpu.memory_space<vmem>>, vector<1x64xf32>
    %69 = vector.broadcast %68 : vector<1x64xf32> to vector<8x64xf32>
    %70 = arith.addf %67, %69 : vector<8x64xf32>
    %cst_46 = arith.constant 0.000000e+00 : f32
    %71 = vector.broadcast %cst_46 : f32 to vector<8x64xf32>
    %72 = arith.maximumf %70, %71 : vector<8x64xf32>
    %73 = arith.truncf %72 : vector<8x64xf32> to vector<8x64xbf16>
    %c0_47 = arith.constant 0 : index
    %c0_48 = arith.constant 0 : index
    %74 = vector.load %arg11[%c0_47, %c0_48] : memref<64x128xbf16, #tpu.memory_space<vmem>>, vector<64x128xbf16>
    %cst_49 = arith.constant dense<0.000000e+00> : vector<8x128xf32>
    %75 = tpu.matmul %73, %74, %cst_49 {dimension_numbers = #tpu.dot_dimension_numbers<[1], [0], [0], [1], [0, 0, 1, 1], [], []>} : vector<8x64xbf16>, vector<64x128xbf16>, vector<8x128xf32> -> vector<8x128xf32>
    %c9 = arith.constant 9 : index
    %c0_50 = arith.constant 0 : index
    %76 = vector.load %arg14[%c9, %c0_50] : memref<12x768xf32, #tpu.memory_space<vmem>>, vector<1x128xf32>
    %77 = vector.broadcast %76 : vector<1x128xf32> to vector<8x128xf32>
    %78 = arith.addf %75, %77 : vector<8x128xf32>
    %cst_51 = arith.constant 0.000000e+00 : f32
    %79 = vector.broadcast %cst_51 : f32 to vector<8x128xf32>
    %80 = arith.maximumf %78, %79 : vector<8x128xf32>
    %81 = arith.truncf %80 : vector<8x128xf32> to vector<8x128xbf16>
    %c0_52 = arith.constant 0 : index
    %c0_53 = arith.constant 0 : index
    %82 = vector.load %arg12[%c0_52, %c0_53] : memref<128x256xbf16, #tpu.memory_space<vmem>>, vector<128x256xbf16>
    %cst_54 = arith.constant dense<0.000000e+00> : vector<8x256xf32>
    %83 = tpu.matmul %81, %82, %cst_54 {dimension_numbers = #tpu.dot_dimension_numbers<[1], [0], [0], [1], [0, 0, 1, 1], [], []>} : vector<8x128xbf16>, vector<128x256xbf16>, vector<8x256xf32> -> vector<8x256xf32>
    %c10 = arith.constant 10 : index
    %c0_55 = arith.constant 0 : index
    %84 = vector.load %arg14[%c10, %c0_55] : memref<12x768xf32, #tpu.memory_space<vmem>>, vector<1x256xf32>
    %85 = vector.broadcast %84 : vector<1x256xf32> to vector<8x256xf32>
    %86 = arith.addf %83, %85 : vector<8x256xf32>
    %cst_56 = arith.constant 0.000000e+00 : f32
    %87 = vector.broadcast %cst_56 : f32 to vector<8x256xf32>
    %88 = arith.maximumf %86, %87 : vector<8x256xf32>
    %89 = arith.truncf %88 : vector<8x256xf32> to vector<8x256xbf16>
    %c0_57 = arith.constant 0 : index
    %c0_58 = arith.constant 0 : index
    %90 = vector.load %arg13[%c0_57, %c0_58] : memref<256x768xbf16, #tpu.memory_space<vmem>>, vector<256x768xbf16>
    %cst_59 = arith.constant dense<0.000000e+00> : vector<8x768xf32>
    %91 = tpu.matmul %89, %90, %cst_59 {dimension_numbers = #tpu.dot_dimension_numbers<[1], [0], [0], [1], [0, 0, 1, 1], [], []>} : vector<8x256xbf16>, vector<256x768xbf16>, vector<8x768xf32> -> vector<8x768xf32>
    %c11 = arith.constant 11 : index
    %c0_60 = arith.constant 0 : index
    %92 = vector.load %arg14[%c11, %c0_60] : memref<12x768xf32, #tpu.memory_space<vmem>>, vector<1x768xf32>
    %93 = vector.broadcast %92 : vector<1x768xf32> to vector<8x768xf32>
    %94 = arith.addf %91, %93 : vector<8x768xf32>
    %95 = math.tanh %94 : vector<8x768xf32>
    %96 = arith.truncf %95 : vector<8x768xf32> to vector<8x768xbf16>
    %c0_61 = arith.constant 0 : index
    %c0_62 = arith.constant 0 : index
    %97 = vector.load %arg16[%c0_61, %c0_62] : memref<8x768xbf16, #tpu.memory_space<vmem>>, vector<8x768xbf16>
    tpu.vector_store %arg16[%c0_61, %c0_62], %96 {strides = array<i32>} : memref<8x768xbf16, #tpu.memory_space<vmem>>, vector<8x768xbf16>,
    return
  }
  func.func @transform_0(%arg0: i32) -> (i32, i32) {
    %c0_i32 = arith.constant 0 : i32
    %c0_i32_0 = arith.constant 0 : i32
    return %arg0, %c0_i32 : i32, i32
  }
  func.func @transform_1(%arg0: i32) -> (i32, i32) {
    %c0_i32 = arith.constant 0 : i32
    %c0_i32_0 = arith.constant 0 : i32
    %c0_i32_1 = arith.constant 0 : i32
    return %c0_i32, %c0_i32_0 : i32, i32
  }
  func.func @transform_2(%arg0: i32) -> (i32, i32) {
    %c0_i32 = arith.constant 0 : i32
    %c0_i32_0 = arith.constant 0 : i32
    %c0_i32_1 = arith.constant 0 : i32
    return %c0_i32, %c0_i32_0 : i32, i32
  }
  func.func @transform_3(%arg0: i32) -> (i32, i32) {
    %c0_i32 = arith.constant 0 : i32
    %c0_i32_0 = arith.constant 0 : i32
    %c0_i32_1 = arith.constant 0 : i32
    return %c0_i32, %c0_i32_0 : i32, i32
  }
  func.func @transform_4(%arg0: i32) -> (i32, i32) {
    %c0_i32 = arith.constant 0 : i32
    %c0_i32_0 = arith.constant 0 : i32
    %c0_i32_1 = arith.constant 0 : i32
    return %c0_i32, %c0_i32_0 : i32, i32
  }
  func.func @transform_5(%arg0: i32) -> (i32, i32) {
    %c0_i32 = arith.constant 0 : i32
    %c0_i32_0 = arith.constant 0 : i32
    %c0_i32_1 = arith.constant 0 : i32
    return %c0_i32, %c0_i32_0 : i32, i32
  }
  func.func @transform_6(%arg0: i32) -> (i32, i32) {
    %c0_i32 = arith.constant 0 : i32
    %c0_i32_0 = arith.constant 0 : i32
    %c0_i32_1 = arith.constant 0 : i32
    return %c0_i32, %c0_i32_0 : i32, i32
  }
  func.func @transform_7(%arg0: i32) -> (i32, i32) {
    %c0_i32 = arith.constant 0 : i32
    %c0_i32_0 = arith.constant 0 : i32
    %c0_i32_1 = arith.constant 0 : i32
    return %c0_i32, %c0_i32_0 : i32, i32
  }
  func.func @transform_8(%arg0: i32) -> (i32, i32) {
    %c0_i32 = arith.constant 0 : i32
    %c0_i32_0 = arith.constant 0 : i32
    %c0_i32_1 = arith.constant 0 : i32
    return %c0_i32, %c0_i32_0 : i32, i32
  }
  func.func @transform_9(%arg0: i32) -> (i32, i32) {
    %c0_i32 = arith.constant 0 : i32
    %c0_i32_0 = arith.constant 0 : i32
    %c0_i32_1 = arith.constant 0 : i32
    return %c0_i32, %c0_i32_0 : i32, i32
  }
  func.func @transform_10(%arg0: i32) -> (i32, i32) {
    %c0_i32 = arith.constant 0 : i32
    %c0_i32_0 = arith.constant 0 : i32
    %c0_i32_1 = arith.constant 0 : i32
    return %c0_i32, %c0_i32_0 : i32, i32
  }
  func.func @transform_11(%arg0: i32) -> (i32, i32) {
    %c0_i32 = arith.constant 0 : i32
    %c0_i32_0 = arith.constant 0 : i32
    %c0_i32_1 = arith.constant 0 : i32
    return %c0_i32, %c0_i32_0 : i32, i32
  }
  func.func @transform_12(%arg0: i32) -> (i32, i32) {
    %c0_i32 = arith.constant 0 : i32
    %c0_i32_0 = arith.constant 0 : i32
    %c0_i32_1 = arith.constant 0 : i32
    return %c0_i32, %c0_i32_0 : i32, i32
  }
  func.func @transform_13(%arg0: i32) -> (i32, i32) {
    %c0_i32 = arith.constant 0 : i32
    %c0_i32_0 = arith.constant 0 : i32
    %c0_i32_1 = arith.constant 0 : i32
    return %c0_i32, %c0_i32_0 : i32, i32
  }
  func.func @transform_14(%arg0: i32) -> (i32, i32) {
    %c0_i32 = arith.constant 0 : i32
    %c0_i32_0 = arith.constant 0 : i32
    return %arg0, %c0_i32 : i32, i32
  }
  func.func @transform_15(%arg0: i32) -> (i32, i32) {
    %c0_i32 = arith.constant 0 : i32
    %c0_i32_0 = arith.constant 0 : i32
    return %arg0, %c0_i32 : i32, i32
  }
}

</mosaic_0001>

<llo_original>
// kernel: autoencoder_forward.1
$region0: #{autoencoder_forward.1}
  #allocation0 [shape = 'u32[]', space=smem, size = 0x4, offset = 0x4, fixed_abs, tag = 'smem constant byte address 0x4 - core index']
  #allocation1 [shape = 'u32[144,128]{1,0:T(1,128)}', space=vmem, size = 0x12000, scoped, tag = 'internal scratch']
  %s0 = inlined_call_operand.vmem [shape: f32[16,768], index: 0, kind: input, shape index: {}]
  %s1 = inlined_call_operand.vmem [shape: bf16[768,256], index: 1, kind: input, shape index: {}]
  %s2 = inlined_call_operand.vmem [shape: bf16[256,128], index: 2, kind: input, shape index: {}]
  %s3 = inlined_call_operand.vmem [shape: bf16[128,64], index: 3, kind: input, shape index: {}]
  %s4 = inlined_call_operand.vmem [shape: bf16[64,32], index: 4, kind: input, shape index: {}]
  %s5 = inlined_call_operand.vmem [shape: bf16[32,24], index: 5, kind: input, shape index: {}]
  %s6 = inlined_call_operand.vmem [shape: bf16[24,128], index: 6, kind: input, shape index: {}]
  %s7 = inlined_call_operand.vmem [shape: bf16[128,24], index: 7, kind: input, shape index: {}]
  %s8 = inlined_call_operand.vmem [shape: bf16[24,32], index: 8, kind: input, shape index: {}]
  %s9 = inlined_call_operand.vmem [shape: bf16[32,64], index: 9, kind: input, shape index: {}]
  %s10 = inlined_call_operand.vmem [shape: bf16[64,128], index: 10, kind: input, shape index: {}]
  %s11 = inlined_call_operand.vmem [shape: bf16[128,256], index: 11, kind: input, shape index: {}]
  %s12 = inlined_call_operand.vmem [shape: bf16[256,768], index: 12, kind: input, shape index: {}]
  %s13 = inlined_call_operand.vmem [shape: f32[12,768], index: 13, kind: input, shape index: {}]
  %s14 = inlined_call_operand.vmem [shape: bf16[16,128], index: 14, kind: output, shape index: {0}]
  %s15 = inlined_call_operand.hbm [shape: bf16[16,768], index: 15, kind: output, shape index: {1}]
  %16 = xla_tuple %s14, %s15
  %s17 = sld [smem:[#allocation0]]
  $region97: #{autoencoder_forward.1} parent=0
    _
  %s19 = ssub.s32 1, %s17
  %s20 = scalar_select 0, %s19, %s17
  $region1: #{autoencoder_forward.1} parent=0
    #allocation2 [shape = 'u8[24576]{0}', space=vmem, size = 0x6000, scoped, tag = 'output window, operand 1']
    #allocation3 [shape = 's32[2]{0}', space=sflag, size = 0x8, scoped, tag = 'scoped memory for autoencoder_forward.1']
    %21 = vsyncpa [#allocation3], 0
    %s22 = scalar_lea.sflag [#allocation3], 1
    %23 = vsyncpa %s22, 0
    loop: start=0, step=1, limit=4
    $region2: #{autoencoder_forward.1} parent=1 // loop_pre_header
      _
    $region3: #{autoencoder_forward.1} parent=1 // loop_header
      %s25 = sphi 0, %s29
      %p26 = scmp.ge.s32.totalorder %s25, 4
      %s35 = sphi 0, %s37
      %s38 = sphi 0, %s35
      %s39 = sphi 0, %s38
      %s55 = sphi 0, %s39
      %s59 = sphi 0, %s59
      %s61 = sphi 0, %s59
      %s62 = sphi 0, %s61
      %s76 = sphi 0, %s62
      %s80 = sphi 0, %s80
      %s82 = sphi 0, %s80
      %s83 = sphi 0, %s82
      %s97 = sphi 0, %s83
      %s101 = sphi 0, %s101
      %s103 = sphi 0, %s101
      %s104 = sphi 0, %s103
      %s118 = sphi 0, %s104
      %s122 = sphi 0, %s122
      %s124 = sphi 0, %s122
      %s125 = sphi 0, %s124
      %s139 = sphi 0, %s125
      %s143 = sphi 0, %s143
      %s145 = sphi 0, %s143
      %s146 = sphi 0, %s145
      %s160 = sphi 0, %s146
      %s164 = sphi 0, %s164
      %s166 = sphi 0, %s164
      %s167 = sphi 0, %s166
      %s181 = sphi 0, %s167
      %s185 = sphi 0, %s185
      %s187 = sphi 0, %s185
      %s188 = sphi 0, %s187
      %s202 = sphi 0, %s188
      %s206 = sphi 0, %s206
      %s208 = sphi 0, %s206
      %s209 = sphi 0, %s208
      %s223 = sphi 0, %s209
      %s227 = sphi 0, %s227
      %s229 = sphi 0, %s227
      %s230 = sphi 0, %s229
      %s244 = sphi 0, %s230
      %s248 = sphi 0, %s248
      %s250 = sphi 0, %s248
      %s251 = sphi 0, %s250
      %s265 = sphi 0, %s251
      %s269 = sphi 0, %s269
      %s271 = sphi 0, %s269
      %s272 = sphi 0, %s271
      %s286 = sphi 0, %s272
      %s290 = sphi 0, %s290
      %s292 = sphi 0, %s290
      %s293 = sphi 0, %s292
      %s307 = sphi 0, %s293
      %s311 = sphi 0, %s311
      %s313 = sphi 0, %s311
      %s314 = sphi 0, %s313
      %s328 = sphi 0, %s314
      %s334 = sphi 0, %s336
      %s337 = sphi 0, %s334
      %s338 = sphi 0, %s337
      %s354 = sphi 0, %s338
      %s360 = sphi 0, %s362
      %s363 = sphi 0, %s360
      %s364 = sphi 0, %s363
      %s380 = sphi 0, %s364
    $region4: #{autoencoder_forward.1} parent=1 // loop_header_branch
      %28 = sbr.rel (%p26) target = $region8
    $region5: #{autoencoder_forward.1} parent=1 // loop_body
      %s30 = ssub.s32 %s25, 1
      %s31 = ssub.s32 %s25, 2
      %s32 = sadd.s32 %s25, 1
      %s33 = ssub.s32 %s25, %s32
      %p34 = scmp.eq.s32.totalorder %s33, 0
      %s36 = sadd.s32 %s35, 1
      %s37 = scalar_select %p34, %s35, %s36
      %p40 = pneg %p34
      %p41 = scmp.eq.s32.totalorder %s25, 1
      %p42 = por %p40, %p41
      %p43 = scmp.ne.s32.totalorder %s35, %s38
      %p44 = scmp.eq.s32.totalorder %s25, 0
      %p45 = por %p43, %p44
      %p46 = scmp.ne.s32.totalorder %s35, %s38
      %p47 = scmp.eq.s32.totalorder %s30, 1
      %p48 = por %p46, %p47
      %p49 = scmp.ne.s32.totalorder %s38, %s39
      %p50 = scmp.eq.s32.totalorder %s30, 0
      %p51 = por %p49, %p50
      %p52 = scmp.ne.s32.totalorder %s38, %s39
      %p53 = scmp.eq.s32.totalorder %s31, 1
      %p54 = por %p52, %p53
      %p56 = scmp.ne.s32.totalorder %s39, %s55
      %p57 = scmp.eq.s32.totalorder %s31, 0
      %p58 = por %p56, %p57
      %s60 = sadd.s32 %s59, 1
      %p63 = scmp.eq.s32.totalorder %s25, 1
      %p64 = scmp.ne.s32.totalorder %s59, %s61
      %p65 = scmp.eq.s32.totalorder %s25, 0
      %p66 = por %p64, %p65
      %p67 = scmp.ne.s32.totalorder %s59, %s61
      %p68 = scmp.eq.s32.totalorder %s30, 1
      %p69 = por %p67, %p68
      %p70 = scmp.ne.s32.totalorder %s61, %s62
      %p71 = scmp.eq.s32.totalorder %s30, 0
      %p72 = por %p70, %p71
      %p73 = scmp.ne.s32.totalorder %s61, %s62
      %p74 = scmp.eq.s32.totalorder %s31, 1
      %p75 = por %p73, %p74
      %p77 = scmp.ne.s32.totalorder %s62, %s76
      %p78 = scmp.eq.s32.totalorder %s31, 0
      %p79 = por %p77, %p78
      %s81 = sadd.s32 %s80, 1
      %p84 = scmp.eq.s32.totalorder %s25, 1
      %p85 = scmp.ne.s32.totalorder %s80, %s82
      %p86 = scmp.eq.s32.totalorder %s25, 0
      %p87 = por %p85, %p86
      %p88 = scmp.ne.s32.totalorder %s80, %s82
      %p89 = scmp.eq.s32.totalorder %s30, 1
      %p90 = por %p88, %p89
      %p91 = scmp.ne.s32.totalorder %s82, %s83
      %p92 = scmp.eq.s32.totalorder %s30, 0
      %p93 = por %p91, %p92
      %p94 = scmp.ne.s32.totalorder %s82, %s83
      %p95 = scmp.eq.s32.totalorder %s31, 1
      %p96 = por %p94, %p95
      %p98 = scmp.ne.s32.totalorder %s83, %s97
      %p99 = scmp.eq.s32.totalorder %s31, 0
      %p100 = por %p98, %p99
      %s102 = sadd.s32 %s101, 1
      %p105 = scmp.eq.s32.totalorder %s25, 1
      %p106 = scmp.ne.s32.totalorder %s101, %s103
      %p107 = scmp.eq.s32.totalorder %s25, 0
      %p108 = por %p106, %p107
      %p109 = scmp.ne.s32.totalorder %s101, %s103
      %p110 = scmp.eq.s32.totalorder %s30, 1
      %p111 = por %p109, %p110
      %p112 = scmp.ne.s32.totalorder %s103, %s104
      %p113 = scmp.eq.s32.totalorder %s30, 0
      %p114 = por %p112, %p113
      %p115 = scmp.ne.s32.totalorder %s103, %s104
      %p116 = scmp.eq.s32.totalorder %s31, 1
      %p117 = por %p115, %p116
      %p119 = scmp.ne.s32.totalorder %s104, %s118
      %p120 = scmp.eq.s32.totalorder %s31, 0
      %p121 = por %p119, %p120
      %s123 = sadd.s32 %s122, 1
      %p126 = scmp.eq.s32.totalorder %s25, 1
      %p127 = scmp.ne.s32.totalorder %s122, %s124
      %p128 = scmp.eq.s32.totalorder %s25, 0
      %p129 = por %p127, %p128
      %p130 = scmp.ne.s32.totalorder %s122, %s124
      %p131 = scmp.eq.s32.totalorder %s30, 1
      %p132 = por %p130, %p131
      %p133 = scmp.ne.s32.totalorder %s124, %s125
      %p134 = scmp.eq.s32.totalorder %s30, 0
      %p135 = por %p133, %p134
      %p136 = scmp.ne.s32.totalorder %s124, %s125
      %p137 = scmp.eq.s32.totalorder %s31, 1
      %p138 = por %p136, %p137
      %p140 = scmp.ne.s32.totalorder %s125, %s139
      %p141 = scmp.eq.s32.totalorder %s31, 0
      %p142 = por %p140, %p141
      %s144 = sadd.s32 %s143, 1
      %p147 = scmp.eq.s32.totalorder %s25, 1
      %p148 = scmp.ne.s32.totalorder %s143, %s145
      %p149 = scmp.eq.s32.totalorder %s25, 0
      %p150 = por %p148, %p149
      %p151 = scmp.ne.s32.totalorder %s143, %s145
      %p152 = scmp.eq.s32.totalorder %s30, 1
      %p153 = por %p151, %p152
      %p154 = scmp.ne.s32.totalorder %s145, %s146
      %p155 = scmp.eq.s32.totalorder %s30, 0
      %p156 = por %p154, %p155
      %p157 = scmp.ne.s32.totalorder %s145, %s146
      %p158 = scmp.eq.s32.totalorder %s31, 1
      %p159 = por %p157, %p158
      %p161 = scmp.ne.s32.totalorder %s146, %s160
      %p162 = scmp.eq.s32.totalorder %s31, 0
      %p163 = por %p161, %p162
      %s165 = sadd.s32 %s164, 1
      %p168 = scmp.eq.s32.totalorder %s25, 1
      %p169 = scmp.ne.s32.totalorder %s164, %s166
      %p170 = scmp.eq.s32.totalorder %s25, 0
      %p171 = por %p169, %p170
      %p172 = scmp.ne.s32.totalorder %s164, %s166
      %p173 = scmp.eq.s32.totalorder %s30, 1
      %p174 = por %p172, %p173
      %p175 = scmp.ne.s32.totalorder %s166, %s167
      %p176 = scmp.eq.s32.totalorder %s30, 0
      %p177 = por %p175, %p176
      %p178 = scmp.ne.s32.totalorder %s166, %s167
      %p179 = scmp.eq.s32.totalorder %s31, 1
      %p180 = por %p178, %p179
      %p182 = scmp.ne.s32.totalorder %s167, %s181
      %p183 = scmp.eq.s32.totalorder %s31, 0
      %p184 = por %p182, %p183
      %s186 = sadd.s32 %s185, 1
      %p189 = scmp.eq.s32.totalorder %s25, 1
      %p190 = scmp.ne.s32.totalorder %s185, %s187
      %p191 = scmp.eq.s32.totalorder %s25, 0
      %p192 = por %p190, %p191
      %p193 = scmp.ne.s32.totalorder %s185, %s187
      %p194 = scmp.eq.s32.totalorder %s30, 1
      %p195 = por %p193, %p194
      %p196 = scmp.ne.s32.totalorder %s187, %s188
      %p197 = scmp.eq.s32.totalorder %s30, 0
      %p198 = por %p196, %p197
      %p199 = scmp.ne.s32.totalorder %s187, %s188
      %p200 = scmp.eq.s32.totalorder %s31, 1
      %p201 = por %p199, %p200
      %p203 = scmp.ne.s32.totalorder %s188, %s202
      %p204 = scmp.eq.s32.totalorder %s31, 0
      %p205 = por %p203, %p204
      %s207 = sadd.s32 %s206, 1
      %p210 = scmp.eq.s32.totalorder %s25, 1
      %p211 = scmp.ne.s32.totalorder %s206, %s208
      %p212 = scmp.eq.s32.totalorder %s25, 0
      %p213 = por %p211, %p212
      %p214 = scmp.ne.s32.totalorder %s206, %s208
      %p215 = scmp.eq.s32.totalorder %s30, 1
      %p216 = por %p214, %p215
      %p217 = scmp.ne.s32.totalorder %s208, %s209
      %p218 = scmp.eq.s32.totalorder %s30, 0
      %p219 = por %p217, %p218
      %p220 = scmp.ne.s32.totalorder %s208, %s209
      %p221 = scmp.eq.s32.totalorder %s31, 1
      %p222 = por %p220, %p221
      %p224 = scmp.ne.s32.totalorder %s209, %s223
      %p225 = scmp.eq.s32.totalorder %s31, 0
      %p226 = por %p224, %p225
      %s228 = sadd.s32 %s227, 1
      %p231 = scmp.eq.s32.totalorder %s25, 1
      %p232 = scmp.ne.s32.totalorder %s227, %s229
      %p233 = scmp.eq.s32.totalorder %s25, 0
      %p234 = por %p232, %p233
      %p235 = scmp.ne.s32.totalorder %s227, %s229
      %p236 = scmp.eq.s32.totalorder %s30, 1
      %p237 = por %p235, %p236
      %p238 = scmp.ne.s32.totalorder %s229, %s230
      %p239 = scmp.eq.s32.totalorder %s30, 0
      %p240 = por %p238, %p239
      %p241 = scmp.ne.s32.totalorder %s229, %s230
      %p242 = scmp.eq.s32.totalorder %s31, 1
      %p243 = por %p241, %p242
      %p245 = scmp.ne.s32.totalorder %s230, %s244
      %p246 = scmp.eq.s32.totalorder %s31, 0
      %p247 = por %p245, %p246
      %s249 = sadd.s32 %s248, 1
      %p252 = scmp.eq.s32.totalorder %s25, 1
      %p253 = scmp.ne.s32.totalorder %s248, %s250
      %p254 = scmp.eq.s32.totalorder %s25, 0
      %p255 = por %p253, %p254
      %p256 = scmp.ne.s32.totalorder %s248, %s250
      %p257 = scmp.eq.s32.totalorder %s30, 1
      %p258 = por %p256, %p257
      %p259 = scmp.ne.s32.totalorder %s250, %s251
      %p260 = scmp.eq.s32.totalorder %s30, 0
      %p261 = por %p259, %p260
      %p262 = scmp.ne.s32.totalorder %s250, %s251
      %p263 = scmp.eq.s32.totalorder %s31, 1
      %p264 = por %p262, %p263
      %p266 = scmp.ne.s32.totalorder %s251, %s265
      %p267 = scmp.eq.s32.totalorder %s31, 0
      %p268 = por %p266, %p267
      %s270 = sadd.s32 %s269, 1
      %p273 = scmp.eq.s32.totalorder %s25, 1
      %p274 = scmp.ne.s32.totalorder %s269, %s271
      %p275 = scmp.eq.s32.totalorder %s25, 0
      %p276 = por %p274, %p275
      %p277 = scmp.ne.s32.totalorder %s269, %s271
      %p278 = scmp.eq.s32.totalorder %s30, 1
      %p279 = por %p277, %p278
      %p280 = scmp.ne.s32.totalorder %s271, %s272
      %p281 = scmp.eq.s32.totalorder %s30, 0
      %p282 = por %p280, %p281
      %p283 = scmp.ne.s32.totalorder %s271, %s272
      %p284 = scmp.eq.s32.totalorder %s31, 1
      %p285 = por %p283, %p284
      %p287 = scmp.ne.s32.totalorder %s272, %s286
      %p288 = scmp.eq.s32.totalorder %s31, 0
      %p289 = por %p287, %p288
      %s291 = sadd.s32 %s290, 1
      %p294 = scmp.eq.s32.totalorder %s25, 1
      %p295 = scmp.ne.s32.totalorder %s290, %s292
      %p296 = scmp.eq.s32.totalorder %s25, 0
      %p297 = por %p295, %p296
      %p298 = scmp.ne.s32.totalorder %s290, %s292
      %p299 = scmp.eq.s32.totalorder %s30, 1
      %p300 = por %p298, %p299
      %p301 = scmp.ne.s32.totalorder %s292, %s293
      %p302 = scmp.eq.s32.totalorder %s30, 0
      %p303 = por %p301, %p302
      %p304 = scmp.ne.s32.totalorder %s292, %s293
      %p305 = scmp.eq.s32.totalorder %s31, 1
      %p306 = por %p304, %p305
      %p308 = scmp.ne.s32.totalorder %s293, %s307
      %p309 = scmp.eq.s32.totalorder %s31, 0
      %p310 = por %p308, %p309
      %s312 = sadd.s32 %s311, 1
      %p315 = scmp.eq.s32.totalorder %s25, 1
      %p316 = scmp.ne.s32.totalorder %s311, %s313
      %p317 = scmp.eq.s32.totalorder %s25, 0
      %p318 = por %p316, %p317
      %p319 = scmp.ne.s32.totalorder %s311, %s313
      %p320 = scmp.eq.s32.totalorder %s30, 1
      %p321 = por %p319, %p320
      %p322 = scmp.ne.s32.totalorder %s313, %s314
      %p323 = scmp.eq.s32.totalorder %s30, 0
      %p324 = por %p322, %p323
      %p325 = scmp.ne.s32.totalorder %s313, %s314
      %p326 = scmp.eq.s32.totalorder %s31, 1
      %p327 = por %p325, %p326
      %p329 = scmp.ne.s32.totalorder %s314, %s328
      %p330 = scmp.eq.s32.totalorder %s31, 0
      %p331 = por %p329, %p330
      %s332 = ssub.s32 %s25, %s32
      %p333 = scmp.eq.s32.totalorder %s332, 0
      %s335 = sadd.s32 %s334, 1
      %s336 = scalar_select %p333, %s334, %s335
      %p339 = pneg %p333
      %p340 = scmp.eq.s32.totalorder %s25, 1
      %p341 = por %p339, %p340
      %p342 = scmp.ne.s32.totalorder %s334, %s337
      %p343 = scmp.eq.s32.totalorder %s25, 0
      %p344 = por %p342, %p343
      %p345 = scmp.ne.s32.totalorder %s334, %s337
      %p346 = scmp.eq.s32.totalorder %s30, 1
      %p347 = por %p345, %p346
      %p348 = scmp.ne.s32.totalorder %s337, %s338
      %p349 = scmp.eq.s32.totalorder %s30, 0
      %p350 = por %p348, %p349
      %p351 = scmp.ne.s32.totalorder %s337, %s338
      %p352 = scmp.eq.s32.totalorder %s31, 1
      %p353 = por %p351, %p352
      %p355 = scmp.ne.s32.totalorder %s338, %s354
      %p356 = scmp.eq.s32.totalorder %s31, 0
      %p357 = por %p355, %p356
      %s358 = ssub.s32 %s25, %s32
      %p359 = scmp.eq.s32.totalorder %s358, 0
      %s361 = sadd.s32 %s360, 1
      %s362 = scalar_select %p359, %s360, %s361
      %p365 = pneg %p359
      %p366 = scmp.eq.s32.totalorder %s25, 1
      %p367 = por %p365, %p366
      %p368 = scmp.ne.s32.totalorder %s360, %s363
      %p369 = scmp.eq.s32.totalorder %s25, 0
      %p370 = por %p368, %p369
      %p371 = scmp.ne.s32.totalorder %s360, %s363
      %p372 = scmp.eq.s32.totalorder %s30, 1
      %p373 = por %p371, %p372
      %p374 = scmp.ne.s32.totalorder %s363, %s364
      %p375 = scmp.eq.s32.totalorder %s30, 0
      %p376 = por %p374, %p375
      %p377 = scmp.ne.s32.totalorder %s363, %s364
      %p378 = scmp.eq.s32.totalorder %s31, 1
      %p379 = por %p377, %p378
      %p381 = scmp.ne.s32.totalorder %s364, %s380
      %p382 = scmp.eq.s32.totalorder %s31, 0
      %p383 = por %p381, %p382
      %p384 = scmp.le.s32.totalorder 1, %s25
      %p385 = scmp.lt.s32.totalorder %s25, 3
      %p386 = pnand %p384, %p385
      %p387 = pneg %p386
      // Predicated region
      $region9: #{autoencoder_forward.1} parent=5 // pred_check
        _
      $region10: #{autoencoder_forward.1} parent=5 // pred_check_branch
        %389 = sbr.rel (%p386) target = $region12
      $region11: #{autoencoder_forward.1} parent=5 // pred_region
        %s390 = ssub.s32 %s25, 1
        // Predicated region
        $region13: #{autoencoder_forward.1} parent=11 // pred_check
          %p391 = pneg %p72
        $region14: #{autoencoder_forward.1} parent=11 // pred_check_branch
          %393 = sbr.rel (%p391) target = $region16
        $region15: #{autoencoder_forward.1} parent=11 // pred_region
          _
        $region16: #{autoencoder_forward.1} parent=11 // pred_fallthru
          _
        // Predicated region
        $region17: #{autoencoder_forward.1} parent=11 // pred_check
          %p394 = pneg %p93
        $region18: #{autoencoder_forward.1} parent=11 // pred_check_branch
          %396 = sbr.rel (%p394) target = $region20
        $region19: #{autoencoder_forward.1} parent=11 // pred_region
          _
        $region20: #{autoencoder_forward.1} parent=11 // pred_fallthru
          _
        // Predicated region
        $region21: #{autoencoder_forward.1} parent=11 // pred_check
          %p397 = pneg %p114
        $region22: #{autoencoder_forward.1} parent=11 // pred_check_branch
          %399 = sbr.rel (%p397) target = $region24
        $region23: #{autoencoder_forward.1} parent=11 // pred_region
          _
        $region24: #{autoencoder_forward.1} parent=11 // pred_fallthru
          _
        // Predicated region
        $region25: #{autoencoder_forward.1} parent=11 // pred_check
          %p400 = pneg %p135
        $region26: #{autoencoder_forward.1} parent=11 // pred_check_branch
          %402 = sbr.rel (%p400) target = $region28
        $region27: #{autoencoder_forward.1} parent=11 // pred_region
          _
        $region28: #{autoencoder_forward.1} parent=11 // pred_fallthru
          _
        // Predicated region
        $region29: #{autoencoder_forward.1} parent=11 // pred_check
          %p403 = pneg %p156
        $region30: #{autoencoder_forward.1} parent=11 // pred_check_branch
          %405 = sbr.rel (%p403) target = $region32
        $region31: #{autoencoder_forward.1} parent=11 // pred_region
          _
        $region32: #{autoencoder_forward.1} parent=11 // pred_fallthru
          _
        // Predicated region
        $region33: #{autoencoder_forward.1} parent=11 // pred_check
          %p406 = pneg %p177
        $region34: #{autoencoder_forward.1} parent=11 // pred_check_branch
          %408 = sbr.rel (%p406) target = $region36
        $region35: #{autoencoder_forward.1} parent=11 // pred_region
          _
        $region36: #{autoencoder_forward.1} parent=11 // pred_fallthru
          _
        // Predicated region
        $region37: #{autoencoder_forward.1} parent=11 // pred_check
          %p409 = pneg %p198
        $region38: #{autoencoder_forward.1} parent=11 // pred_check_branch
          %411 = sbr.rel (%p409) target = $region40
        $region39: #{autoencoder_forward.1} parent=11 // pred_region
          _
        $region40: #{autoencoder_forward.1} parent=11 // pred_fallthru
          _
        // Predicated region
        $region41: #{autoencoder_forward.1} parent=11 // pred_check
          %p412 = pneg %p219
        $region42: #{autoencoder_forward.1} parent=11 // pred_check_branch
          %414 = sbr.rel (%p412) target = $region44
        $region43: #{autoencoder_forward.1} parent=11 // pred_region
          _
        $region44: #{autoencoder_forward.1} parent=11 // pred_fallthru
          _
        // Predicated region
        $region45: #{autoencoder_forward.1} parent=11 // pred_check
          %p415 = pneg %p240
        $region46: #{autoencoder_forward.1} parent=11 // pred_check_branch
          %417 = sbr.rel (%p415) target = $region48
        $region47: #{autoencoder_forward.1} parent=11 // pred_region
          _
        $region48: #{autoencoder_forward.1} parent=11 // pred_fallthru
          _
        // Predicated region
        $region49: #{autoencoder_forward.1} parent=11 // pred_check
          %p418 = pneg %p261
        $region50: #{autoencoder_forward.1} parent=11 // pred_check_branch
          %420 = sbr.rel (%p418) target = $region52
        $region51: #{autoencoder_forward.1} parent=11 // pred_region
          _
        $region52: #{autoencoder_forward.1} parent=11 // pred_fallthru
          _
        // Predicated region
        $region53: #{autoencoder_forward.1} parent=11 // pred_check
          %p421 = pneg %p282
        $region54: #{autoencoder_forward.1} parent=11 // pred_check_branch
          %423 = sbr.rel (%p421) target = $region56
        $region55: #{autoencoder_forward.1} parent=11 // pred_region
          _
        $region56: #{autoencoder_forward.1} parent=11 // pred_fallthru
          _
        // Predicated region
        $region57: #{autoencoder_forward.1} parent=11 // pred_check
          %p424 = pneg %p303
        $region58: #{autoencoder_forward.1} parent=11 // pred_check_branch
          %426 = sbr.rel (%p424) target = $region60
        $region59: #{autoencoder_forward.1} parent=11 // pred_region
          _
        $region60: #{autoencoder_forward.1} parent=11 // pred_fallthru
          _
        // Predicated region
        $region61: #{autoencoder_forward.1} parent=11 // pred_check
          %p427 = pneg %p324
        $region62: #{autoencoder_forward.1} parent=11 // pred_check_branch
          %429 = sbr.rel (%p427) target = $region64
        $region63: #{autoencoder_forward.1} parent=11 // pred_region
          _
        $region64: #{autoencoder_forward.1} parent=11 // pred_fallthru
          _
      $region12: #{autoencoder_forward.1} parent=5 // pred_fallthru
        _
      %p430 = scmp.lt.s32.totalorder %s25, 2
      // Predicated region
      $region65: #{autoencoder_forward.1} parent=5 // pred_check
        %p431 = pneg %p430
      $region66: #{autoencoder_forward.1} parent=5 // pred_check_branch
        %433 = sbr.rel (%p431) target = $region68
      $region67: #{autoencoder_forward.1} parent=5 // pred_region
        // Predicated region
        $region69: #{autoencoder_forward.1} parent=67 // pred_check
          %p434 = pneg %p45
        $region70: #{autoencoder_forward.1} parent=67 // pred_check_branch
          %436 = sbr.rel (%p434) target = $region72
        $region71: #{autoencoder_forward.1} parent=67 // pred_region
          %p437 = scmp.lt.s32.totalorder %s25, 1
          %s438 = scalar_select %p437, %s25, 1
          %s439 = smul.addr %s438, 6
          %s440 = smul.addr %s439, 8
          %s441 = scalar_lea.vmem %s0, %s440
        $region72: #{autoencoder_forward.1} parent=67 // pred_fallthru
          _
      $region68: #{autoencoder_forward.1} parent=5 // pred_fallthru
        _
      %p442 = scmp.le.s32.totalorder 1, %s25
      %p443 = scmp.lt.s32.totalorder %s25, 3
      %p444 = pnand %p442, %p443
      %p445 = pneg %p444
      // Predicated region
      $region73: #{autoencoder_forward.1} parent=5 // pred_check
        _
      $region74: #{autoencoder_forward.1} parent=5 // pred_check_branch
        %447 = sbr.rel (%p444) target = $region76
      $region75: #{autoencoder_forward.1} parent=5 // pred_region
        %s448 = ssub.s32 %s25, 1
        %p449 = scmp.lt.s32.totalorder %s30, 1
        %s450 = scalar_select %p449, %s30, 1
        %s451 = smul.addr %s450, 6
        %s452 = smul.addr %s451, 8
        %s453 = scalar_lea.vmem %s0, %s452
        %p454 = pneg %p51
        %p455 = pneg %p48
        %p456 = pneg %p72
        %p457 = pneg %p69
        %p458 = pneg %p93
        %p459 = pneg %p90
        %p460 = pneg %p114
        %p461 = pneg %p111
        %p462 = pneg %p135
        %p463 = pneg %p132
        %p464 = pneg %p156
        %p465 = pneg %p153
        %p466 = pneg %p177
        %p467 = pneg %p174
        %p468 = pneg %p198
        %p469 = pneg %p195
        %p470 = pneg %p219
        %p471 = pneg %p216
        %p472 = pneg %p240
        %p473 = pneg %p237
        %p474 = pneg %p261
        %p475 = pneg %p258
        %p476 = pneg %p282
        %p477 = pneg %p279
        %p478 = pneg %p303
        %p479 = pneg %p300
        %p480 = pneg %p324
        %p481 = pneg %p321
        %p482 = pneg %p350
        %p483 = pneg %p347
        %p484 = scmp.lt.s32.totalorder %s30, 1
        %s485 = scalar_select %p484, %s30, 1
        %s486 = smul.addr %s485, 4
        %s487 = scalar_lea.vmem %s14, %s486
        %p488 = pneg %p376
        %p489 = pneg %p373
        %s490 = sand.u32 %s363, 1
        %s491 = scalar_lea.sflag [#allocation3], %s490
        %s492 = sand.u32 %s363, 1
        %s493 = smul.addr %s492, 24
        %s494 = scalar_lea.vmem [#allocation2], %s493
        %p495 = scmp.lt.s32.totalorder %s30, 1
        %s496 = scalar_select %p495, %s30, 1
        %s497 = smul.addr %s496, 6
        %s498 = smul.addr %s497, 8
        %s499 = scalar_lea.vmem %s0, %s498
        %p500 = scmp.lt.s32.totalorder %s30, 1
        %s501 = scalar_select %p500, %s30, 1
        %s502 = smul.addr %s501, 4
        %s503 = scalar_lea.vmem %s14, %s502
        %v505 = vld [vmem:[%s499] sm:$0xff]
        %v506 = vld [vmem:[%s499 + $0x8] sm:$0xff]
        %v507 = vld [vmem:[%s499 + $0x10] sm:$0xff]
        %v508 = vld [vmem:[%s499 + $0x18] sm:$0xff]
        %v509 = vld [vmem:[%s499 + $0x20] sm:$0xff]
        %v510 = vld [vmem:[%s499 + $0x28] sm:$0xff]
        %v511 = vpack.c.bf16 %v505, %v505
        %v512 = vpack.c.bf16 %v506, %v506
        %v513 = vpack.c.bf16 %v507, %v507
        %v514 = vpack.c.bf16 %v508, %v508
        %v515 = vpack.c.bf16 %v509, %v509
        %v516 = vpack.c.bf16 %v510, %v510
        %v517 = vld [vmem:[%s1] sm:$0xff]
        %v518 = vld [vmem:[%s1 + $0x8] sm:$0xff]
        %v519 = vld [vmem:[%s1 + $0x10] sm:$0xff]
        %v520 = vld [vmem:[%s1 + $0x18] sm:$0xff]
        %v521 = vld [vmem:[%s1 + $0x20] sm:$0xff]
        %v522 = vld [vmem:[%s1 + $0x28] sm:$0xff]
        %v523 = vld [vmem:[%s1 + $0x30] sm:$0xff]
        %v524 = vld [vmem:[%s1 + $0x38] sm:$0xff]
        %v525 = vld [vmem:[%s1 + $0x40] sm:$0xff]
        %v526 = vld [vmem:[%s1 + $0x48] sm:$0xff]
        %v527 = vld [vmem:[%s1 + $0x50] sm:$0xff]
        %v528 = vld [vmem:[%s1 + $0x58] sm:$0xff]
        %v529 = vld [vmem:[%s1 + $0x60] sm:$0xff]
        %v530 = vld [vmem:[%s1 + $0x68] sm:$0xff]
        %v531 = vld [vmem:[%s1 + $0x70] sm:$0xff]
        %v532 = vld [vmem:[%s1 + $0x78] sm:$0xff]
        %v533 = vld [vmem:[%s1 + $0x80] sm:$0xff]
        %v534 = vld [vmem:[%s1 + $0x88] sm:$0xff]
        %v535 = vld [vmem:[%s1 + $0x90] sm:$0xff]
        %v536 = vld [vmem:[%s1 + $0x98] sm:$0xff]
        %v537 = vld [vmem:[%s1 + $0xa0] sm:$0xff]
        %v538 = vld [vmem:[%s1 + $0xa8] sm:$0xff]
        %v539 = vld [vmem:[%s1 + $0xb0] sm:$0xff]
        %v540 = vld [vmem:[%s1 + $0xb8] sm:$0xff]
        %v541 = vld [vmem:[%s1 + $0xc0] sm:$0xff]
        %v542 = vld [vmem:[%s1 + $0xc8] sm:$0xff]
        %v543 = vld [vmem:[%s1 + $0xd0] sm:$0xff]
        %v544 = vld [vmem:[%s1 + $0xd8] sm:$0xff]
        %v545 = vld [vmem:[%s1 + $0xe0] sm:$0xff]
        %v546 = vld [vmem:[%s1 + $0xe8] sm:$0xff]
        %v547 = vld [vmem:[%s1 + $0xf0] sm:$0xff]
        %v548 = vld [vmem:[%s1 + $0xf8] sm:$0xff]
        %v549 = vld [vmem:[%s1 + $0x100] sm:$0xff]
        %v550 = vld [vmem:[%s1 + $0x108] sm:$0xff]
        %v551 = vld [vmem:[%s1 + $0x110] sm:$0xff]
        %v552 = vld [vmem:[%s1 + $0x118] sm:$0xff]
        %v553 = vld [vmem:[%s1 + $0x120] sm:$0xff]
        %v554 = vld [vmem:[%s1 + $0x128] sm:$0xff]
        %v555 = vld [vmem:[%s1 + $0x130] sm:$0xff]
        %v556 = vld [vmem:[%s1 + $0x138] sm:$0xff]
        %v557 = vld [vmem:[%s1 + $0x140] sm:$0xff]
        %v558 = vld [vmem:[%s1 + $0x148] sm:$0xff]
        %v559 = vld [vmem:[%s1 + $0x150] sm:$0xff]
        %v560 = vld [vmem:[%s1 + $0x158] sm:$0xff]
        %v561 = vld [vmem:[%s1 + $0x160] sm:$0xff]
        %v562 = vld [vmem:[%s1 + $0x168] sm:$0xff]
        %v563 = vld [vmem:[%s1 + $0x170] sm:$0xff]
        %v564 = vld [vmem:[%s1 + $0x178] sm:$0xff]
        %v565 = vld [vmem:[%s1 + $0x180] sm:$0xff]
        %v566 = vld [vmem:[%s1 + $0x188] sm:$0xff]
        %v567 = vld [vmem:[%s1 + $0x190] sm:$0xff]
        %v568 = vld [vmem:[%s1 + $0x198] sm:$0xff]
        %v569 = vld [vmem:[%s1 + $0x1a0] sm:$0xff]
        %v570 = vld [vmem:[%s1 + $0x1a8] sm:$0xff]
        %v571 = vld [vmem:[%s1 + $0x1b0] sm:$0xff]
        %v572 = vld [vmem:[%s1 + $0x1b8] sm:$0xff]
        %v573 = vld [vmem:[%s1 + $0x1c0] sm:$0xff]
        %v574 = vld [vmem:[%s1 + $0x1c8] sm:$0xff]
        %v575 = vld [vmem:[%s1 + $0x1d0] sm:$0xff]
        %v576 = vld [vmem:[%s1 + $0x1d8] sm:$0xff]
        %v577 = vld [vmem:[%s1 + $0x1e0] sm:$0xff]
        %v578 = vld [vmem:[%s1 + $0x1e8] sm:$0xff]
        %v579 = vld [vmem:[%s1 + $0x1f0] sm:$0xff]
        %v580 = vld [vmem:[%s1 + $0x1f8] sm:$0xff]
        %v581 = vld [vmem:[%s1 + $0x200] sm:$0xff]
        %v582 = vld [vmem:[%s1 + $0x208] sm:$0xff]
        %v583 = vld [vmem:[%s1 + $0x210] sm:$0xff]
        %v584 = vld [vmem:[%s1 + $0x218] sm:$0xff]
        %v585 = vld [vmem:[%s1 + $0x220] sm:$0xff]
        %v586 = vld [vmem:[%s1 + $0x228] sm:$0xff]
        %v587 = vld [vmem:[%s1 + $0x230] sm:$0xff]
        %v588 = vld [vmem:[%s1 + $0x238] sm:$0xff]
        %v589 = vld [vmem:[%s1 + $0x240] sm:$0xff]
        %v590 = vld [vmem:[%s1 + $0x248] sm:$0xff]
        %v591 = vld [vmem:[%s1 + $0x250] sm:$0xff]
        %v592 = vld [vmem:[%s1 + $0x258] sm:$0xff]
        %v593 = vld [vmem:[%s1 + $0x260] sm:$0xff]
        %v594 = vld [vmem:[%s1 + $0x268] sm:$0xff]
        %v595 = vld [vmem:[%s1 + $0x270] sm:$0xff]
        %v596 = vld [vmem:[%s1 + $0x278] sm:$0xff]
        %v597 = vld [vmem:[%s1 + $0x280] sm:$0xff]
        %v598 = vld [vmem:[%s1 + $0x288] sm:$0xff]
        %v599 = vld [vmem:[%s1 + $0x290] sm:$0xff]
        %v600 = vld [vmem:[%s1 + $0x298] sm:$0xff]
        %v601 = vld [vmem:[%s1 + $0x2a0] sm:$0xff]
        %v602 = vld [vmem:[%s1 + $0x2a8] sm:$0xff]
        %v603 = vld [vmem:[%s1 + $0x2b0] sm:$0xff]
        %v604 = vld [vmem:[%s1 + $0x2b8] sm:$0xff]
        %v605 = vld [vmem:[%s1 + $0x2c0] sm:$0xff]
        %v606 = vld [vmem:[%s1 + $0x2c8] sm:$0xff]
        %v607 = vld [vmem:[%s1 + $0x2d0] sm:$0xff]
        %v608 = vld [vmem:[%s1 + $0x2d8] sm:$0xff]
        %v609 = vld [vmem:[%s1 + $0x2e0] sm:$0xff]
        %v610 = vld [vmem:[%s1 + $0x2e8] sm:$0xff]
        %v611 = vld [vmem:[%s1 + $0x2f0] sm:$0xff]
        %v612 = vld [vmem:[%s1 + $0x2f8] sm:$0xff]
        %v613 = vld [vmem:[%s13] ss:$8 sm:$0x3]
        %v615 = vlaneseq
        %v616 = vshrl.u32 %v615, 7
        %v617 = vsub.s32 0, %v616
        %v618 = vrot.slane %v613, %v617
        %v619 = vlaneseq
        %v620 = vshrl.u32 %v619, 7
        %v621 = vsub.s32 1, %v620
        %v622 = vrot.slane %v613, %v621
        %v721 = vunpack.c.l.b16 %v517
        %v722 = vunpack.c.h.b16 %v517
        %v723 = vunpack.c.l.b16 %v518
        %v724 = vunpack.c.h.b16 %v518
        %v725 = vunpack.c.l.b16 %v519
        %v726 = vunpack.c.h.b16 %v519
        %v727 = vunpack.c.l.b16 %v520
        %v728 = vunpack.c.h.b16 %v520
        %v729 = vunpack.c.l.b16 %v521
        %v730 = vunpack.c.h.b16 %v521
        %v731 = vunpack.c.l.b16 %v522
        %v732 = vunpack.c.h.b16 %v522
        %v733 = vunpack.c.l.b16 %v523
        %v734 = vunpack.c.h.b16 %v523
        %v735 = vunpack.c.l.b16 %v524
        %v736 = vunpack.c.h.b16 %v524
        %v737 = vunpack.c.l.b16 %v525
        %v738 = vunpack.c.h.b16 %v525
        %v739 = vunpack.c.l.b16 %v526
        %v740 = vunpack.c.h.b16 %v526
        %v741 = vunpack.c.l.b16 %v527
        %v742 = vunpack.c.h.b16 %v527
        %v743 = vunpack.c.l.b16 %v528
        %v744 = vunpack.c.h.b16 %v528
        %v745 = vunpack.c.l.b16 %v529
        %v746 = vunpack.c.h.b16 %v529
        %v747 = vunpack.c.l.b16 %v530
        %v748 = vunpack.c.h.b16 %v530
        %v749 = vunpack.c.l.b16 %v531
        %v750 = vunpack.c.h.b16 %v531
        %v751 = vunpack.c.l.b16 %v532
        %v752 = vunpack.c.h.b16 %v532
        %v753 = vunpack.c.l.b16 %v533
        %v754 = vunpack.c.h.b16 %v533
        %v755 = vunpack.c.l.b16 %v534
        %v756 = vunpack.c.h.b16 %v534
        %v757 = vunpack.c.l.b16 %v535
        %v758 = vunpack.c.h.b16 %v535
        %v759 = vunpack.c.l.b16 %v536
        %v760 = vunpack.c.h.b16 %v536
        %v761 = vunpack.c.l.b16 %v537
        %v762 = vunpack.c.h.b16 %v537
        %v763 = vunpack.c.l.b16 %v538
        %v764 = vunpack.c.h.b16 %v538
        %v765 = vunpack.c.l.b16 %v539
        %v766 = vunpack.c.h.b16 %v539
        %v767 = vunpack.c.l.b16 %v540
        %v768 = vunpack.c.h.b16 %v540
        %v769 = vunpack.c.l.b16 %v541
        %v770 = vunpack.c.h.b16 %v541
        %v771 = vunpack.c.l.b16 %v542
        %v772 = vunpack.c.h.b16 %v542
        %v773 = vunpack.c.l.b16 %v543
        %v774 = vunpack.c.h.b16 %v543
        %v775 = vunpack.c.l.b16 %v544
        %v776 = vunpack.c.h.b16 %v544
        %v777 = vunpack.c.l.b16 %v545
        %v778 = vunpack.c.h.b16 %v545
        %v779 = vunpack.c.l.b16 %v546
        %v780 = vunpack.c.h.b16 %v546
        %v781 = vunpack.c.l.b16 %v547
        %v782 = vunpack.c.h.b16 %v547
        %v783 = vunpack.c.l.b16 %v548
        %v784 = vunpack.c.h.b16 %v548
        %v785 = vunpack.c.l.b16 %v549
        %v786 = vunpack.c.h.b16 %v549
        %v787 = vunpack.c.l.b16 %v550
        %v788 = vunpack.c.h.b16 %v550
        %v789 = vunpack.c.l.b16 %v551
        %v790 = vunpack.c.h.b16 %v551
        %v791 = vunpack.c.l.b16 %v552
        %v792 = vunpack.c.h.b16 %v552
        %v793 = vunpack.c.l.b16 %v553
        %v794 = vunpack.c.h.b16 %v553
        %v795 = vunpack.c.l.b16 %v554
        %v796 = vunpack.c.h.b16 %v554
        %v797 = vunpack.c.l.b16 %v555
        %v798 = vunpack.c.h.b16 %v555
        %v799 = vunpack.c.l.b16 %v556
        %v800 = vunpack.c.h.b16 %v556
        %v801 = vunpack.c.l.b16 %v557
        %v802 = vunpack.c.h.b16 %v557
        %v803 = vunpack.c.l.b16 %v558
        %v804 = vunpack.c.h.b16 %v558
        %v805 = vunpack.c.l.b16 %v559
        %v806 = vunpack.c.h.b16 %v559
        %v807 = vunpack.c.l.b16 %v560
        %v808 = vunpack.c.h.b16 %v560
        %v809 = vunpack.c.l.b16 %v561
        %v810 = vunpack.c.h.b16 %v561
        %v811 = vunpack.c.l.b16 %v562
        %v812 = vunpack.c.h.b16 %v562
        %v813 = vunpack.c.l.b16 %v563
        %v814 = vunpack.c.h.b16 %v563
        %v815 = vunpack.c.l.b16 %v564
        %v816 = vunpack.c.h.b16 %v564
        %v817 = vunpack.c.l.b16 %v565
        %v818 = vunpack.c.h.b16 %v565
        %v819 = vunpack.c.l.b16 %v566
        %v820 = vunpack.c.h.b16 %v566
        %v821 = vunpack.c.l.b16 %v567
        %v822 = vunpack.c.h.b16 %v567
        %v823 = vunpack.c.l.b16 %v568
        %v824 = vunpack.c.h.b16 %v568
        %v825 = vunpack.c.l.b16 %v569
        %v826 = vunpack.c.h.b16 %v569
        %v827 = vunpack.c.l.b16 %v570
        %v828 = vunpack.c.h.b16 %v570
        %v829 = vunpack.c.l.b16 %v571
        %v830 = vunpack.c.h.b16 %v571
        %v831 = vunpack.c.l.b16 %v572
        %v832 = vunpack.c.h.b16 %v572
        %v833 = vunpack.c.l.b16 %v573
        %v834 = vunpack.c.h.b16 %v573
        %v835 = vunpack.c.l.b16 %v574
        %v836 = vunpack.c.h.b16 %v574
        %v837 = vunpack.c.l.b16 %v575
        %v838 = vunpack.c.h.b16 %v575
        %v839 = vunpack.c.l.b16 %v576
        %v840 = vunpack.c.h.b16 %v576
        %v841 = vunpack.c.l.b16 %v577
        %v842 = vunpack.c.h.b16 %v577
        %v843 = vunpack.c.l.b16 %v578
        %v844 = vunpack.c.h.b16 %v578
        %v845 = vunpack.c.l.b16 %v579
        %v846 = vunpack.c.h.b16 %v579
        %v847 = vunpack.c.l.b16 %v580
        %v848 = vunpack.c.h.b16 %v580
        %v849 = vunpack.c.l.b16 %v581
        %v850 = vunpack.c.h.b16 %v581
        %v851 = vunpack.c.l.b16 %v582
        %v852 = vunpack.c.h.b16 %v582
        %v853 = vunpack.c.l.b16 %v583
        %v854 = vunpack.c.h.b16 %v583
        %v855 = vunpack.c.l.b16 %v584
        %v856 = vunpack.c.h.b16 %v584
        %v857 = vunpack.c.l.b16 %v585
        %v858 = vunpack.c.h.b16 %v585
        %v859 = vunpack.c.l.b16 %v586
        %v860 = vunpack.c.h.b16 %v586
        %v861 = vunpack.c.l.b16 %v587
        %v862 = vunpack.c.h.b16 %v587
        %v863 = vunpack.c.l.b16 %v588
        %v864 = vunpack.c.h.b16 %v588
        %v865 = vunpack.c.l.b16 %v589
        %v866 = vunpack.c.h.b16 %v589
        %v867 = vunpack.c.l.b16 %v590
        %v868 = vunpack.c.h.b16 %v590
        %v869 = vunpack.c.l.b16 %v591
        %v870 = vunpack.c.h.b16 %v591
        %v871 = vunpack.c.l.b16 %v592
        %v872 = vunpack.c.h.b16 %v592
        %v873 = vunpack.c.l.b16 %v593
        %v874 = vunpack.c.h.b16 %v593
        %v875 = vunpack.c.l.b16 %v594
        %v876 = vunpack.c.h.b16 %v594
        %v877 = vunpack.c.l.b16 %v595
        %v878 = vunpack.c.h.b16 %v595
        %v879 = vunpack.c.l.b16 %v596
        %v880 = vunpack.c.h.b16 %v596
        %v881 = vunpack.c.l.b16 %v597
        %v882 = vunpack.c.h.b16 %v597
        %v883 = vunpack.c.l.b16 %v598
        %v884 = vunpack.c.h.b16 %v598
        %v885 = vunpack.c.l.b16 %v599
        %v886 = vunpack.c.h.b16 %v599
        %v887 = vunpack.c.l.b16 %v600
        %v888 = vunpack.c.h.b16 %v600
        %v889 = vunpack.c.l.b16 %v601
        %v890 = vunpack.c.h.b16 %v601
        %v891 = vunpack.c.l.b16 %v602
        %v892 = vunpack.c.h.b16 %v602
        %v893 = vunpack.c.l.b16 %v603
        %v894 = vunpack.c.h.b16 %v603
        %v895 = vunpack.c.l.b16 %v604
        %v896 = vunpack.c.h.b16 %v604
        %v897 = vunpack.c.l.b16 %v605
        %v898 = vunpack.c.h.b16 %v605
        %v899 = vunpack.c.l.b16 %v606
        %v900 = vunpack.c.h.b16 %v606
        %v901 = vunpack.c.l.b16 %v607
        %v902 = vunpack.c.h.b16 %v607
        %v903 = vunpack.c.l.b16 %v608
        %v904 = vunpack.c.h.b16 %v608
        %v905 = vunpack.c.l.b16 %v609
        %v906 = vunpack.c.h.b16 %v609
        %v907 = vunpack.c.l.b16 %v610
        %v908 = vunpack.c.h.b16 %v610
        %v909 = vunpack.c.l.b16 %v611
        %v910 = vunpack.c.h.b16 %v611
        %v911 = vunpack.c.l.b16 %v612
        %v912 = vunpack.c.h.b16 %v612
        %v913 = vpack.c.b16 %v723, %v721
        %v914 = vpack.c.b16 %v724, %v722
        %v915 = vpack.c.b16 %v727, %v725
        %v916 = vpack.c.b16 %v728, %v726
        %v917 = vpack.c.b16 %v731, %v729
        %v918 = vpack.c.b16 %v732, %v730
        %v919 = vpack.c.b16 %v735, %v733
        %v920 = vpack.c.b16 %v736, %v734
        %v921 = vpack.c.b16 %v739, %v737
        %v922 = vpack.c.b16 %v740, %v738
        %v923 = vpack.c.b16 %v743, %v741
        %v924 = vpack.c.b16 %v744, %v742
        %v925 = vpack.c.b16 %v747, %v745
        %v926 = vpack.c.b16 %v748, %v746
        %v927 = vpack.c.b16 %v751, %v749
        %v928 = vpack.c.b16 %v752, %v750
        %v929 = vpack.c.b16 %v755, %v753
        %v930 = vpack.c.b16 %v756, %v754
        %v931 = vpack.c.b16 %v759, %v757
        %v932 = vpack.c.b16 %v760, %v758
        %v933 = vpack.c.b16 %v763, %v761
        %v934 = vpack.c.b16 %v764, %v762
        %v935 = vpack.c.b16 %v767, %v765
        %v936 = vpack.c.b16 %v768, %v766
        %v937 = vpack.c.b16 %v771, %v769
        %v938 = vpack.c.b16 %v772, %v770
        %v939 = vpack.c.b16 %v775, %v773
        %v940 = vpack.c.b16 %v776, %v774
        %v941 = vpack.c.b16 %v779, %v777
        %v942 = vpack.c.b16 %v780, %v778
        %v943 = vpack.c.b16 %v783, %v781
        %v944 = vpack.c.b16 %v784, %v782
        %v945 = vpack.c.b16 %v787, %v785
        %v946 = vpack.c.b16 %v788, %v786
        %v947 = vpack.c.b16 %v791, %v789
        %v948 = vpack.c.b16 %v792, %v790
        %v949 = vpack.c.b16 %v795, %v793
        %v950 = vpack.c.b16 %v796, %v794
        %v951 = vpack.c.b16 %v799, %v797
        %v952 = vpack.c.b16 %v800, %v798
        %v953 = vpack.c.b16 %v803, %v801
        %v954 = vpack.c.b16 %v804, %v802
        %v955 = vpack.c.b16 %v807, %v805
        %v956 = vpack.c.b16 %v808, %v806
        %v957 = vpack.c.b16 %v811, %v809
        %v958 = vpack.c.b16 %v812, %v810
        %v959 = vpack.c.b16 %v815, %v813
        %v960 = vpack.c.b16 %v816, %v814
        %v961 = vpack.c.b16 %v819, %v817
        %v962 = vpack.c.b16 %v820, %v818
        %v963 = vpack.c.b16 %v823, %v821
        %v964 = vpack.c.b16 %v824, %v822
        %v965 = vpack.c.b16 %v827, %v825
        %v966 = vpack.c.b16 %v828, %v826
        %v967 = vpack.c.b16 %v831, %v829
        %v968 = vpack.c.b16 %v832, %v830
        %v969 = vpack.c.b16 %v835, %v833
        %v970 = vpack.c.b16 %v836, %v834
        %v971 = vpack.c.b16 %v839, %v837
        %v972 = vpack.c.b16 %v840, %v838
        %v973 = vpack.c.b16 %v843, %v841
        %v974 = vpack.c.b16 %v844, %v842
        %v975 = vpack.c.b16 %v847, %v845
        %v976 = vpack.c.b16 %v848, %v846
        %v977 = vpack.c.b16 %v851, %v849
        %v978 = vpack.c.b16 %v852, %v850
        %v979 = vpack.c.b16 %v855, %v853
        %v980 = vpack.c.b16 %v856, %v854
        %v981 = vpack.c.b16 %v859, %v857
        %v982 = vpack.c.b16 %v860, %v858
        %v983 = vpack.c.b16 %v863, %v861
        %v984 = vpack.c.b16 %v864, %v862
        %v985 = vpack.c.b16 %v867, %v865
        %v986 = vpack.c.b16 %v868, %v866
        %v987 = vpack.c.b16 %v871, %v869
        %v988 = vpack.c.b16 %v872, %v870
        %v989 = vpack.c.b16 %v875, %v873
        %v990 = vpack.c.b16 %v876, %v874
        %v991 = vpack.c.b16 %v879, %v877
        %v992 = vpack.c.b16 %v880, %v878
        %v993 = vpack.c.b16 %v883, %v881
        %v994 = vpack.c.b16 %v884, %v882
        %v995 = vpack.c.b16 %v887, %v885
        %v996 = vpack.c.b16 %v888, %v886
        %v997 = vpack.c.b16 %v891, %v889
        %v998 = vpack.c.b16 %v892, %v890
        %v999 = vpack.c.b16 %v895, %v893
        %v1000 = vpack.c.b16 %v896, %v894
        %v1001 = vpack.c.b16 %v899, %v897
        %v1002 = vpack.c.b16 %v900, %v898
        %v1003 = vpack.c.b16 %v903, %v901
        %v1004 = vpack.c.b16 %v904, %v902
        %v1005 = vpack.c.b16 %v907, %v905
        %v1006 = vpack.c.b16 %v908, %v906
        %v1007 = vpack.c.b16 %v911, %v909
        %v1008 = vpack.c.b16 %v912, %v910
        %1105 = vmatprep.subr.bf16.mxu0 %v914
        %1106 = vmatpush1.bf16.msra.mxu0 %v913
        %1107 = vmatprep.subr.bf16.mxu0 %v916
        %1108 = vmatpush1.bf16.msra.mxu0 %v915
        %1109 = vmatprep.subr.bf16.mxu0 %v918
        %1110 = vmatpush1.bf16.msra.mxu0 %v917
        %1111 = vmatprep.subr.bf16.mxu0 %v920
        %1112 = vmatpush1.bf16.msra.mxu0 %v919
        %1113 = vmatprep.subr.bf16.mxu0 %v922
        %1114 = vmatpush1.bf16.msra.mxu0 %v921
        %1115 = vmatprep.subr.bf16.mxu0 %v924
        %1116 = vmatpush1.bf16.msra.mxu0 %v923
        %1117 = vmatprep.subr.bf16.mxu0 %v926
        %1118 = vmatpush1.bf16.msra.mxu0 %v925
        %1119 = vmatprep.subr.bf16.mxu0 %v928
        %1120 = vmatpush1.bf16.msra.mxu0 %v927
        %1121 = vmatprep.subr.bf16.mxu0 %v930
        %1122 = vmatpush1.bf16.msra.mxu0 %v929
        %1123 = vmatprep.subr.bf16.mxu0 %v932
        %1124 = vmatpush1.bf16.msra.mxu0 %v931
        %1125 = vmatprep.subr.bf16.mxu0 %v934
        %1126 = vmatpush1.bf16.msra.mxu0 %v933
        %1127 = vmatprep.subr.bf16.mxu0 %v936
        %1128 = vmatpush1.bf16.msra.mxu0 %v935
        %1129 = vmatprep.subr.bf16.mxu0 %v938
        %1130 = vmatpush1.bf16.msra.mxu0 %v937
        %1131 = vmatprep.subr.bf16.mxu0 %v940
        %1132 = vmatpush1.bf16.msra.mxu0 %v939
        %1133 = vmatprep.subr.bf16.mxu0 %v942
        %1134 = vmatpush1.bf16.msra.mxu0 %v941
        %1135 = vmatprep.subr.bf16.mxu0 %v944
        %1136 = vmatpush1.bf16.msra.mxu0 %v943
        %1137 = vmatprep.mubr.bf16.mxu0 %v512
        %1138 = vmatmul.mubr.bf16.gmra.mrb[0].mxu0 %v511
        %v1139 = vpop.f32.mrb[0].mxu0
        %v1140 = vadd.f32 %v618, %v1139
        %v1141 = vpop.f32.mrb[0].mxu0
        %v1142 = vadd.f32 %v622, %v1141
        %v1143 = vpop.f32.mrb[0].mxu0
        %v1144 = vpop.f32.mrb[0].mxu0
        %1145 = vdwg.mxu0
        %1146 = vmatprep.subr.bf16.mxu0 %v946
        %1147 = vmatpush1.bf16.msra.mxu0 %v945
        %1148 = vmatprep.subr.bf16.mxu0 %v948
        %1149 = vmatpush1.bf16.msra.mxu0 %v947
        %1150 = vmatprep.subr.bf16.mxu0 %v950
        %1151 = vmatpush1.bf16.msra.mxu0 %v949
        %1152 = vmatprep.subr.bf16.mxu0 %v952
        %1153 = vmatpush1.bf16.msra.mxu0 %v951
        %1154 = vmatprep.subr.bf16.mxu0 %v954
        %1155 = vmatpush1.bf16.msra.mxu0 %v953
        %1156 = vmatprep.subr.bf16.mxu0 %v956
        %1157 = vmatpush1.bf16.msra.mxu0 %v955
        %1158 = vmatprep.subr.bf16.mxu0 %v958
        %1159 = vmatpush1.bf16.msra.mxu0 %v957
        %1160 = vmatprep.subr.bf16.mxu0 %v960
        %1161 = vmatpush1.bf16.msra.mxu0 %v959
        %1162 = vmatprep.subr.bf16.mxu0 %v962
        %1163 = vmatpush1.bf16.msra.mxu0 %v961
        %1164 = vmatprep.subr.bf16.mxu0 %v964
        %1165 = vmatpush1.bf16.msra.mxu0 %v963
        %1166 = vmatprep.subr.bf16.mxu0 %v966
        %1167 = vmatpush1.bf16.msra.mxu0 %v965
        %1168 = vmatprep.subr.bf16.mxu0 %v968
        %1169 = vmatpush1.bf16.msra.mxu0 %v967
        %1170 = vmatprep.subr.bf16.mxu0 %v970
        %1171 = vmatpush1.bf16.msra.mxu0 %v969
        %1172 = vmatprep.subr.bf16.mxu0 %v972
        %1173 = vmatpush1.bf16.msra.mxu0 %v971
        %1174 = vmatprep.subr.bf16.mxu0 %v974
        %1175 = vmatpush1.bf16.msra.mxu0 %v973
        %1176 = vmatprep.subr.bf16.mxu0 %v976
        %1177 = vmatpush1.bf16.msra.mxu0 %v975
        %1178 = vmatprep.mubr.bf16.mxu0 %v514
        %1179 = vmatmul.mubr.bf16.gmra.mrb[0].mxu0 %v513
        %v1180 = vpop.f32.mrb[0].mxu0
        %v1181 = vadd.f32 %v1140, %v1180
        %v1182 = vpop.f32.mrb[0].mxu0
        %v1183 = vadd.f32 %v1142, %v1182
        %v1184 = vpop.f32.mrb[0].mxu0
        %v1185 = vpop.f32.mrb[0].mxu0
        %1186 = vdwg.mxu0
        %1187 = vmatprep.subr.bf16.mxu0 %v978
        %1188 = vmatpush1.bf16.msra.mxu0 %v977
        %1189 = vmatprep.subr.bf16.mxu0 %v980
        %1190 = vmatpush1.bf16.msra.mxu0 %v979
        %1191 = vmatprep.subr.bf16.mxu0 %v982
        %1192 = vmatpush1.bf16.msra.mxu0 %v981
        %1193 = vmatprep.subr.bf16.mxu0 %v984
        %1194 = vmatpush1.bf16.msra.mxu0 %v983
        %1195 = vmatprep.subr.bf16.mxu0 %v986
        %1196 = vmatpush1.bf16.msra.mxu0 %v985
        %1197 = vmatprep.subr.bf16.mxu0 %v988
        %1198 = vmatpush1.bf16.msra.mxu0 %v987
        %1199 = vmatprep.subr.bf16.mxu0 %v990
        %1200 = vmatpush1.bf16.msra.mxu0 %v989
        %1201 = vmatprep.subr.bf16.mxu0 %v992
        %1202 = vmatpush1.bf16.msra.mxu0 %v991
        %1203 = vmatprep.subr.bf16.mxu0 %v994
        %1204 = vmatpush1.bf16.msra.mxu0 %v993
        %1205 = vmatprep.subr.bf16.mxu0 %v996
        %1206 = vmatpush1.bf16.msra.mxu0 %v995
        %1207 = vmatprep.subr.bf16.mxu0 %v998
        %1208 = vmatpush1.bf16.msra.mxu0 %v997
        %1209 = vmatprep.subr.bf16.mxu0 %v1000
        %1210 = vmatpush1.bf16.msra.mxu0 %v999
        %1211 = vmatprep.subr.bf16.mxu0 %v1002
        %1212 = vmatpush1.bf16.msra.mxu0 %v1001
        %1213 = vmatprep.subr.bf16.mxu0 %v1004
        %1214 = vmatpush1.bf16.msra.mxu0 %v1003
        %1215 = vmatprep.subr.bf16.mxu0 %v1006
        %1216 = vmatpush1.bf16.msra.mxu0 %v1005
        %1217 = vmatprep.subr.bf16.mxu0 %v1008
        %1218 = vmatpush1.bf16.msra.mxu0 %v1007
        %1219 = vmatprep.mubr.bf16.mxu0 %v516
        %1220 = vmatmul.mubr.bf16.gmra.mrb[0].mxu0 %v515
        %v1221 = vpop.f32.mrb[0].mxu0
        %v1222 = vadd.f32 %v1181, %v1221
        %v1223 = vpop.f32.mrb[0].mxu0
        %v1224 = vadd.f32 %v1183, %v1223
        %v1225 = vpop.f32.mrb[0].mxu0
        %v1226 = vpop.f32.mrb[0].mxu0
        %1227 = vdwg.mxu0
        %v1228 = vmax.f32 %v1222, 0.0
        %v1229 = vmax.f32 %v1224, 0.0
        %v1230 = vpack.c.bf16 %v1228, %v1228
        %v1231 = vpack.c.bf16 %v1229, %v1229
        %v1232 = vld [vmem:[%s2] sm:$0xf]
        %v1233 = vld [vmem:[%s2 + $0x4] sm:$0xf]
        %v1234 = vld [vmem:[%s2 + $0x8] sm:$0xf]
        %v1235 = vld [vmem:[%s2 + $0xc] sm:$0xf]
        %v1236 = vld [vmem:[%s2 + $0x10] sm:$0xf]
        %v1237 = vld [vmem:[%s2 + $0x14] sm:$0xf]
        %v1238 = vld [vmem:[%s2 + $0x18] sm:$0xf]
        %v1239 = vld [vmem:[%s2 + $0x1c] sm:$0xf]
        %v1240 = vld [vmem:[%s2 + $0x20] sm:$0xf]
        %v1241 = vld [vmem:[%s2 + $0x24] sm:$0xf]
        %v1242 = vld [vmem:[%s2 + $0x28] sm:$0xf]
        %v1243 = vld [vmem:[%s2 + $0x2c] sm:$0xf]
        %v1244 = vld [vmem:[%s2 + $0x30] sm:$0xf]
        %v1245 = vld [vmem:[%s2 + $0x34] sm:$0xf]
        %v1246 = vld [vmem:[%s2 + $0x38] sm:$0xf]
        %v1247 = vld [vmem:[%s2 + $0x3c] sm:$0xf]
        %v1248 = vld [vmem:[%s2 + $0x40] sm:$0xf]
        %v1249 = vld [vmem:[%s2 + $0x44] sm:$0xf]
        %v1250 = vld [vmem:[%s2 + $0x48] sm:$0xf]
        %v1251 = vld [vmem:[%s2 + $0x4c] sm:$0xf]
        %v1252 = vld [vmem:[%s2 + $0x50] sm:$0xf]
        %v1253 = vld [vmem:[%s2 + $0x54] sm:$0xf]
        %v1254 = vld [vmem:[%s2 + $0x58] sm:$0xf]
        %v1255 = vld [vmem:[%s2 + $0x5c] sm:$0xf]
        %v1256 = vld [vmem:[%s2 + $0x60] sm:$0xf]
        %v1257 = vld [vmem:[%s2 + $0x64] sm:$0xf]
        %v1258 = vld [vmem:[%s2 + $0x68] sm:$0xf]
        %v1259 = vld [vmem:[%s2 + $0x6c] sm:$0xf]
        %v1260 = vld [vmem:[%s2 + $0x70] sm:$0xf]
        %v1261 = vld [vmem:[%s2 + $0x74] sm:$0xf]
        %v1262 = vld [vmem:[%s2 + $0x78] sm:$0xf]
        %v1263 = vld [vmem:[%s2 + $0x7c] sm:$0xf]
        %v1264 = vld [vmem:[%s13 + $0x1] ss:$0 sm:$0xff]
        %v1297 = vunpack.c.l.b16 %v1232
        %v1298 = vunpack.c.l.b16 %v1233
        %v1299 = vunpack.c.l.b16 %v1234
        %v1300 = vunpack.c.l.b16 %v1235
        %v1301 = vunpack.c.l.b16 %v1236
        %v1302 = vunpack.c.l.b16 %v1237
        %v1303 = vunpack.c.l.b16 %v1238
        %v1304 = vunpack.c.l.b16 %v1239
        %v1305 = vunpack.c.l.b16 %v1240
        %v1306 = vunpack.c.l.b16 %v1241
        %v1307 = vunpack.c.l.b16 %v1242
        %v1308 = vunpack.c.l.b16 %v1243
        %v1309 = vunpack.c.l.b16 %v1244
        %v1310 = vunpack.c.l.b16 %v1245
        %v1311 = vunpack.c.l.b16 %v1246
        %v1312 = vunpack.c.l.b16 %v1247
        %v1313 = vunpack.c.l.b16 %v1248
        %v1314 = vunpack.c.l.b16 %v1249
        %v1315 = vunpack.c.l.b16 %v1250
        %v1316 = vunpack.c.l.b16 %v1251
        %v1317 = vunpack.c.l.b16 %v1252
        %v1318 = vunpack.c.l.b16 %v1253
        %v1319 = vunpack.c.l.b16 %v1254
        %v1320 = vunpack.c.l.b16 %v1255
        %v1321 = vunpack.c.l.b16 %v1256
        %v1322 = vunpack.c.l.b16 %v1257
        %v1323 = vunpack.c.l.b16 %v1258
        %v1324 = vunpack.c.l.b16 %v1259
        %v1325 = vunpack.c.l.b16 %v1260
        %v1326 = vunpack.c.l.b16 %v1261
        %v1327 = vunpack.c.l.b16 %v1262
        %v1328 = vunpack.c.l.b16 %v1263
        %v1329 = vpack.c.b16 %v1298, %v1297
        %v1330 = vpack.c.b16 %v1300, %v1299
        %v1331 = vpack.c.b16 %v1302, %v1301
        %v1332 = vpack.c.b16 %v1304, %v1303
        %v1333 = vpack.c.b16 %v1306, %v1305
        %v1334 = vpack.c.b16 %v1308, %v1307
        %v1335 = vpack.c.b16 %v1310, %v1309
        %v1336 = vpack.c.b16 %v1312, %v1311
        %v1337 = vpack.c.b16 %v1314, %v1313
        %v1338 = vpack.c.b16 %v1316, %v1315
        %v1339 = vpack.c.b16 %v1318, %v1317
        %v1340 = vpack.c.b16 %v1320, %v1319
        %v1341 = vpack.c.b16 %v1322, %v1321
        %v1342 = vpack.c.b16 %v1324, %v1323
        %v1343 = vpack.c.b16 %v1326, %v1325
        %v1344 = vpack.c.b16 %v1328, %v1327
        %1361 = vmatprep.subr.bf16.mxu0 0
        %1362 = vmatpush1.bf16.msra.mxu0 %v1329
        %1363 = vmatprep.subr.bf16.mxu0 0
        %1364 = vmatpush1.bf16.msra.mxu0 %v1330
        %1365 = vmatprep.subr.bf16.mxu0 0
        %1366 = vmatpush1.bf16.msra.mxu0 %v1331
        %1367 = vmatprep.subr.bf16.mxu0 0
        %1368 = vmatpush1.bf16.msra.mxu0 %v1332
        %1369 = vmatprep.subr.bf16.mxu0 0
        %1370 = vmatpush1.bf16.msra.mxu0 %v1333
        %1371 = vmatprep.subr.bf16.mxu0 0
        %1372 = vmatpush1.bf16.msra.mxu0 %v1334
        %1373 = vmatprep.subr.bf16.mxu0 0
        %1374 = vmatpush1.bf16.msra.mxu0 %v1335
        %1375 = vmatprep.subr.bf16.mxu0 0
        %1376 = vmatpush1.bf16.msra.mxu0 %v1336
        %1377 = vmatprep.subr.bf16.mxu0 0
        %1378 = vmatpush1.bf16.msra.mxu0 %v1337
        %1379 = vmatprep.subr.bf16.mxu0 0
        %1380 = vmatpush1.bf16.msra.mxu0 %v1338
        %1381 = vmatprep.subr.bf16.mxu0 0
        %1382 = vmatpush1.bf16.msra.mxu0 %v1339
        %1383 = vmatprep.subr.bf16.mxu0 0
        %1384 = vmatpush1.bf16.msra.mxu0 %v1340
        %1385 = vmatprep.subr.bf16.mxu0 0
        %1386 = vmatpush1.bf16.msra.mxu0 %v1341
        %1387 = vmatprep.subr.bf16.mxu0 0
        %1388 = vmatpush1.bf16.msra.mxu0 %v1342
        %1389 = vmatprep.subr.bf16.mxu0 0
        %1390 = vmatpush1.bf16.msra.mxu0 %v1343
        %1391 = vmatprep.subr.bf16.mxu0 0
        %1392 = vmatpush1.bf16.msra.mxu0 %v1344
        %1393 = vmatprep.mubr.bf16.mxu0 %v1231
        %1394 = vmatmul.mubr.bf16.gmra.mrb[0].mxu0 %v1230
        %v1395 = vpop.f32.mrb[0].mxu0
        %v1396 = vadd.f32 %v1264, %v1395
        %v1397 = vpop.f32.mrb[0].mxu0
        %v1398 = vpop.f32.mrb[0].mxu0
        %v1399 = vpop.f32.mrb[0].mxu0
        %1400 = vdwg.mxu0
        %v1401 = vmax.f32 %v1396, 0.0
        %v1402 = vpack.c.bf16 %v1401, %v1401
        %v1403 = vld [vmem:[%s3] sm:$0xf]
        %v1404 = vld [vmem:[%s3 + $0x4] sm:$0xf]
        %v1405 = vld [vmem:[%s3 + $0x8] sm:$0xf]
        %v1406 = vld [vmem:[%s3 + $0xc] sm:$0xf]
        %v1407 = vld [vmem:[%s3 + $0x10] sm:$0xf]
        %v1408 = vld [vmem:[%s3 + $0x14] sm:$0xf]
        %v1409 = vld [vmem:[%s3 + $0x18] sm:$0xf]
        %v1410 = vld [vmem:[%s3 + $0x1c] sm:$0xf]
        %v1411 = vld [vmem:[%s3 + $0x20] sm:$0xf]
        %v1412 = vld [vmem:[%s3 + $0x24] sm:$0xf]
        %v1413 = vld [vmem:[%s3 + $0x28] sm:$0xf]
        %v1414 = vld [vmem:[%s3 + $0x2c] sm:$0xf]
        %v1415 = vld [vmem:[%s3 + $0x30] sm:$0xf]
        %v1416 = vld [vmem:[%s3 + $0x34] sm:$0xf]
        %v1417 = vld [vmem:[%s3 + $0x38] sm:$0xf]
        %v1418 = vld [vmem:[%s3 + $0x3c] sm:$0xf]
        %v1419 = vld [vmem:[%s13 + $0x2] ss:$0 sm:$0xff]
        %v1436 = vunpack.c.l.b16 %v1403
        %v1437 = vunpack.c.l.b16 %v1404
        %v1438 = vunpack.c.l.b16 %v1405
        %v1439 = vunpack.c.l.b16 %v1406
        %v1440 = vunpack.c.l.b16 %v1407
        %v1441 = vunpack.c.l.b16 %v1408
        %v1442 = vunpack.c.l.b16 %v1409
        %v1443 = vunpack.c.l.b16 %v1410
        %v1444 = vunpack.c.l.b16 %v1411
        %v1445 = vunpack.c.l.b16 %v1412
        %v1446 = vunpack.c.l.b16 %v1413
        %v1447 = vunpack.c.l.b16 %v1414
        %v1448 = vunpack.c.l.b16 %v1415
        %v1449 = vunpack.c.l.b16 %v1416
        %v1450 = vunpack.c.l.b16 %v1417
        %v1451 = vunpack.c.l.b16 %v1418
        %v1452 = vpack.c.b16 %v1437, %v1436
        %v1453 = vpack.c.b16 %v1439, %v1438
        %v1454 = vpack.c.b16 %v1441, %v1440
        %v1455 = vpack.c.b16 %v1443, %v1442
        %v1456 = vpack.c.b16 %v1445, %v1444
        %v1457 = vpack.c.b16 %v1447, %v1446
        %v1458 = vpack.c.b16 %v1449, %v1448
        %v1459 = vpack.c.b16 %v1451, %v1450
        %1468 = vmatprep.subr.bf16.mxu0 0
        %1469 = vmatpush1.bf16.msra.mxu0 %v1452
        %1470 = vmatprep.subr.bf16.mxu0 0
        %1471 = vmatpush1.bf16.msra.mxu0 %v1453
        %1472 = vmatprep.subr.bf16.mxu0 0
        %1473 = vmatpush1.bf16.msra.mxu0 %v1454
        %1474 = vmatprep.subr.bf16.mxu0 0
        %1475 = vmatpush1.bf16.msra.mxu0 %v1455
        %1476 = vmatprep.subr.bf16.mxu0 0
        %1477 = vmatpush1.bf16.msra.mxu0 %v1456
        %1478 = vmatprep.subr.bf16.mxu0 0
        %1479 = vmatpush1.bf16.msra.mxu0 %v1457
        %1480 = vmatprep.subr.bf16.mxu0 0
        %1481 = vmatpush1.bf16.msra.mxu0 %v1458
        %1482 = vmatprep.subr.bf16.mxu0 0
        %1483 = vmatpush1.bf16.msra.mxu0 %v1459
        %1484 = vmatprep.subr.bf16.mxu0 0
        %1485 = vmatpush1.bf16.msra.mxu0 0
        %1486 = vmatprep.subr.bf16.mxu0 0
        %1487 = vmatpush1.bf16.msra.mxu0 0
        %1488 = vmatprep.subr.bf16.mxu0 0
        %1489 = vmatpush1.bf16.msra.mxu0 0
        %1490 = vmatprep.subr.bf16.mxu0 0
        %1491 = vmatpush1.bf16.msra.mxu0 0
        %1492 = vmatprep.subr.bf16.mxu0 0
        %1493 = vmatpush1.bf16.msra.mxu0 0
        %1494 = vmatprep.subr.bf16.mxu0 0
        %1495 = vmatpush1.bf16.msra.mxu0 0
        %1496 = vmatprep.subr.bf16.mxu0 0
        %1497 = vmatpush1.bf16.msra.mxu0 0
        %1498 = vmatprep.subr.bf16.mxu0 0
        %1499 = vmatpush1.bf16.msra.mxu0 0
        %1500 = vmatprep.mubr.bf16.mxu0 0
        %1501 = vmatmul.mubr.bf16.gmra.mrb[0].mxu0 %v1402
        %v1502 = vpop.f32.mrb[0].mxu0
        %v1503 = vadd.f32 %v1419, %v1502
        %v1504 = vpop.f32.mrb[0].mxu0
        %v1505 = vpop.f32.mrb[0].mxu0
        %v1506 = vpop.f32.mrb[0].mxu0
        %1507 = vdwg.mxu0
        %v1508 = vmax.f32 %v1503, 0.0
        %v1509 = vpack.c.bf16 %v1508, %v1508
        %v1510 = vld [vmem:[%s4] sm:$0xf]
        %v1511 = vld [vmem:[%s4 + $0x4] sm:$0xf]
        %v1512 = vld [vmem:[%s4 + $0x8] sm:$0xf]
        %v1513 = vld [vmem:[%s4 + $0xc] sm:$0xf]
        %v1514 = vld [vmem:[%s4 + $0x10] sm:$0xf]
        %v1515 = vld [vmem:[%s4 + $0x14] sm:$0xf]
        %v1516 = vld [vmem:[%s4 + $0x18] sm:$0xf]
        %v1517 = vld [vmem:[%s4 + $0x1c] sm:$0xf]
        %v1518 = vld [vmem:[%s13 + $0x3] ss:$0 sm:$0xff]
        %v1527 = vunpack.c.l.b16 %v1510
        %v1528 = vunpack.c.l.b16 %v1511
        %v1529 = vunpack.c.l.b16 %v1512
        %v1530 = vunpack.c.l.b16 %v1513
        %v1531 = vunpack.c.l.b16 %v1514
        %v1532 = vunpack.c.l.b16 %v1515
        %v1533 = vunpack.c.l.b16 %v1516
        %v1534 = vunpack.c.l.b16 %v1517
        %v1535 = vpack.c.b16 %v1528, %v1527
        %v1536 = vpack.c.b16 %v1530, %v1529
        %v1537 = vpack.c.b16 %v1532, %v1531
        %v1538 = vpack.c.b16 %v1534, %v1533
        %vm1543 = vcmask 523264
        %v1545 = vsel %vm1543, %v1509, 0
        %1547 = vmatprep.subr.bf16.mxu0 0
        %1548 = vmatpush1.bf16.msra.mxu0 %v1535
        %1549 = vmatprep.subr.bf16.mxu0 0
        %1550 = vmatpush1.bf16.msra.mxu0 %v1536
        %1551 = vmatprep.subr.bf16.mxu0 0
        %1552 = vmatpush1.bf16.msra.mxu0 %v1537
        %1553 = vmatprep.subr.bf16.mxu0 0
        %1554 = vmatpush1.bf16.msra.mxu0 %v1538
        %1555 = vmatprep.subr.bf16.mxu0 0
        %1556 = vmatpush1.bf16.msra.mxu0 0
        %1557 = vmatprep.subr.bf16.mxu0 0
        %1558 = vmatpush1.bf16.msra.mxu0 0
        %1559 = vmatprep.subr.bf16.mxu0 0
        %1560 = vmatpush1.bf16.msra.mxu0 0
        %1561 = vmatprep.subr.bf16.mxu0 0
        %1562 = vmatpush1.bf16.msra.mxu0 0
        %1563 = vmatprep.subr.bf16.mxu0 0
        %1564 = vmatpush1.bf16.msra.mxu0 0
        %1565 = vmatprep.subr.bf16.mxu0 0
        %1566 = vmatpush1.bf16.msra.mxu0 0
        %1567 = vmatprep.subr.bf16.mxu0 0
        %1568 = vmatpush1.bf16.msra.mxu0 0
        %1569 = vmatprep.subr.bf16.mxu0 0
        %1570 = vmatpush1.bf16.msra.mxu0 0
        %1571 = vmatprep.subr.bf16.mxu0 0
        %1572 = vmatpush1.bf16.msra.mxu0 0
        %1573 = vmatprep.subr.bf16.mxu0 0
        %1574 = vmatpush1.bf16.msra.mxu0 0
        %1575 = vmatprep.subr.bf16.mxu0 0
        %1576 = vmatpush1.bf16.msra.mxu0 0
        %1577 = vmatprep.subr.bf16.mxu0 0
        %1578 = vmatpush1.bf16.msra.mxu0 0
        %1579 = vmatprep.mubr.bf16.mxu0 0
        %1580 = vmatmul.mubr.bf16.gmra.mrb[0].mxu0 %v1545
        %v1581 = vpop.f32.mrb[0].mxu0
        %v1582 = vadd.f32 %v1518, %v1581
        %v1583 = vpop.f32.mrb[0].mxu0
        %v1584 = vpop.f32.mrb[0].mxu0
        %v1585 = vpop.f32.mrb[0].mxu0
        %1586 = vdwg.mxu0
        %v1587 = vmax.f32 %v1582, 0.0
        %v1588 = vpack.c.bf16 %v1587, %v1587
        %v1589 = vld [vmem:[%s5] sm:$0xf]
        %v1590 = vld [vmem:[%s5 + $0x4] sm:$0xf]
        %v1591 = vld [vmem:[%s5 + $0x8] sm:$0xf]
        %v1592 = vld [vmem:[%s5 + $0xc] sm:$0xf]
        %v1593 = vld [vmem:[%s13 + $0x4] ss:$0 sm:$0xff]
        %v1598 = vunpack.c.l.b16 %v1589
        %v1599 = vunpack.c.l.b16 %v1590
        %v1600 = vunpack.c.l.b16 %v1591
        %v1601 = vunpack.c.l.b16 %v1592
        %v1602 = vpack.c.b16 %v1599, %v1598
        %v1603 = vpack.c.b16 %v1601, %v1600
        %vm1606 = vcmask 261120
        %v1608 = vsel %vm1606, %v1588, 0
        %1610 = vmatprep.subr.bf16.mxu0 0
        %1611 = vmatpush1.bf16.msra.mxu0 %v1602
        %1612 = vmatprep.subr.bf16.mxu0 0
        %1613 = vmatpush1.bf16.msra.mxu0 %v1603
        %1614 = vmatprep.subr.bf16.mxu0 0
        %1615 = vmatpush1.bf16.msra.mxu0 0
        %1616 = vmatprep.subr.bf16.mxu0 0
        %1617 = vmatpush1.bf16.msra.mxu0 0
        %1618 = vmatprep.subr.bf16.mxu0 0
        %1619 = vmatpush1.bf16.msra.mxu0 0
        %1620 = vmatprep.subr.bf16.mxu0 0
        %1621 = vmatpush1.bf16.msra.mxu0 0
        %1622 = vmatprep.subr.bf16.mxu0 0
        %1623 = vmatpush1.bf16.msra.mxu0 0
        %1624 = vmatprep.subr.bf16.mxu0 0
        %1625 = vmatpush1.bf16.msra.mxu0 0
        %1626 = vmatprep.subr.bf16.mxu0 0
        %1627 = vmatpush1.bf16.msra.mxu0 0
        %1628 = vmatprep.subr.bf16.mxu0 0
        %1629 = vmatpush1.bf16.msra.mxu0 0
        %1630 = vmatprep.subr.bf16.mxu0 0
        %1631 = vmatpush1.bf16.msra.mxu0 0
        %1632 = vmatprep.subr.bf16.mxu0 0
        %1633 = vmatpush1.bf16.msra.mxu0 0
        %1634 = vmatprep.subr.bf16.mxu0 0
        %1635 = vmatpush1.bf16.msra.mxu0 0
        %1636 = vmatprep.subr.bf16.mxu0 0
        %1637 = vmatpush1.bf16.msra.mxu0 0
        %1638 = vmatprep.subr.bf16.mxu0 0
        %1639 = vmatpush1.bf16.msra.mxu0 0
        %1640 = vmatprep.subr.bf16.mxu0 0
        %1641 = vmatpush1.bf16.msra.mxu0 0
        %1642 = vmatprep.mubr.bf16.mxu0 0
        %1643 = vmatmul.mubr.bf16.gmra.mrb[0].mxu0 %v1608
        %v1644 = vpop.f32.mrb[0].mxu0
        %v1645 = vadd.f32 %v1593, %v1644
        %v1646 = vpop.f32.mrb[0].mxu0
        %v1647 = vpop.f32.mrb[0].mxu0
        %v1648 = vpop.f32.mrb[0].mxu0
        %1649 = vdwg.mxu0
        %v1650 = vmax.f32 %v1645, 0.0
        %v1651 = vpack.c.bf16 %v1650, %v1650
        %v1652 = vld [vmem:[%s6] sm:$0xf]
        %v1653 = vld [vmem:[%s6 + $0x4] sm:$0xf]
        %v1654 = vld [vmem:[%s6 + $0x8] sm:$0xf]
        %v1655 = vld [vmem:[%s13 + $0x5] ss:$0 sm:$0xff]
        %v1659 = vunpack.c.l.b16 %v1652
        %v1660 = vunpack.c.l.b16 %v1653
        %v1661 = vunpack.c.l.b16 %v1654
        %v1662 = vpack.c.b16 %v1660, %v1659
        %v1663 = vpack.c.b16 %v1661, %v1661
        %vm1665 = vcmask 195584
        %v1667 = vsel %vm1665, %v1651, 0
        %vm1669 = vcmask 1043456
        %v1671 = vsel %vm1669, %v1663, 0
        %1673 = vmatprep.subr.bf16.mxu0 0
        %1674 = vmatpush1.bf16.msra.mxu0 %v1662
        %1675 = vmatprep.subr.bf16.mxu0 0
        %1676 = vmatpush1.bf16.msra.mxu0 %v1671
        %1677 = vmatprep.subr.bf16.mxu0 0
        %1678 = vmatpush1.bf16.msra.mxu0 0
        %1679 = vmatprep.subr.bf16.mxu0 0
        %1680 = vmatpush1.bf16.msra.mxu0 0
        %1681 = vmatprep.subr.bf16.mxu0 0
        %1682 = vmatpush1.bf16.msra.mxu0 0
        %1683 = vmatprep.subr.bf16.mxu0 0
        %1684 = vmatpush1.bf16.msra.mxu0 0
        %1685 = vmatprep.subr.bf16.mxu0 0
        %1686 = vmatpush1.bf16.msra.mxu0 0
        %1687 = vmatprep.subr.bf16.mxu0 0
        %1688 = vmatpush1.bf16.msra.mxu0 0
        %1689 = vmatprep.subr.bf16.mxu0 0
        %1690 = vmatpush1.bf16.msra.mxu0 0
        %1691 = vmatprep.subr.bf16.mxu0 0
        %1692 = vmatpush1.bf16.msra.mxu0 0
        %1693 = vmatprep.subr.bf16.mxu0 0
        %1694 = vmatpush1.bf16.msra.mxu0 0
        %1695 = vmatprep.subr.bf16.mxu0 0
        %1696 = vmatpush1.bf16.msra.mxu0 0
        %1697 = vmatprep.subr.bf16.mxu0 0
        %1698 = vmatpush1.bf16.msra.mxu0 0
        %1699 = vmatprep.subr.bf16.mxu0 0
        %1700 = vmatpush1.bf16.msra.mxu0 0
        %1701 = vmatprep.subr.bf16.mxu0 0
        %1702 = vmatpush1.bf16.msra.mxu0 0
        %1703 = vmatprep.subr.bf16.mxu0 0
        %1704 = vmatpush1.bf16.msra.mxu0 0
        %1705 = vmatprep.mubr.bf16.mxu0 0
        %1706 = vmatmul.mubr.bf16.gmra.mrb[0].mxu0 %v1667
        %v1707 = vpop.f32.mrb[0].mxu0
        %v1708 = vadd.f32 %v1655, %v1707
        %v1709 = vpop.f32.mrb[0].mxu0
        %v1710 = vpop.f32.mrb[0].mxu0
        %v1711 = vpop.f32.mrb[0].mxu0
        %1712 = vdwg.mxu0
        %v1713 = vpack.c.bf16 %v1708, %v1708
        %1714 = vst [vmem:[%s503] sm:$0xf] %v1713
        %v1715 = vld [vmem:[%s7] sm:$0xf]
        %v1716 = vld [vmem:[%s7 + $0x4] sm:$0xf]
        %v1717 = vld [vmem:[%s7 + $0x8] sm:$0xf]
        %v1718 = vld [vmem:[%s7 + $0xc] sm:$0xf]
        %v1719 = vld [vmem:[%s7 + $0x10] sm:$0xf]
        %v1720 = vld [vmem:[%s7 + $0x14] sm:$0xf]
        %v1721 = vld [vmem:[%s7 + $0x18] sm:$0xf]
        %v1722 = vld [vmem:[%s7 + $0x1c] sm:$0xf]
        %v1723 = vld [vmem:[%s7 + $0x20] sm:$0xf]
        %v1724 = vld [vmem:[%s7 + $0x24] sm:$0xf]
        %v1725 = vld [vmem:[%s7 + $0x28] sm:$0xf]
        %v1726 = vld [vmem:[%s7 + $0x2c] sm:$0xf]
        %v1727 = vld [vmem:[%s7 + $0x30] sm:$0xf]
        %v1728 = vld [vmem:[%s7 + $0x34] sm:$0xf]
        %v1729 = vld [vmem:[%s7 + $0x38] sm:$0xf]
        %v1730 = vld [vmem:[%s7 + $0x3c] sm:$0xf]
        %v1731 = vld [vmem:[%s13 + $0x6] ss:$0 sm:$0xff]
        %v1748 = vunpack.c.l.b16 %v1715
        %v1749 = vunpack.c.l.b16 %v1716
        %v1750 = vunpack.c.l.b16 %v1717
        %v1751 = vunpack.c.l.b16 %v1718
        %v1752 = vunpack.c.l.b16 %v1719
        %v1753 = vunpack.c.l.b16 %v1720
        %v1754 = vunpack.c.l.b16 %v1721
        %v1755 = vunpack.c.l.b16 %v1722
        %v1756 = vunpack.c.l.b16 %v1723
        %v1757 = vunpack.c.l.b16 %v1724
        %v1758 = vunpack.c.l.b16 %v1725
        %v1759 = vunpack.c.l.b16 %v1726
        %v1760 = vunpack.c.l.b16 %v1727
        %v1761 = vunpack.c.l.b16 %v1728
        %v1762 = vunpack.c.l.b16 %v1729
        %v1763 = vunpack.c.l.b16 %v1730
        %v1764 = vpack.c.b16 %v1749, %v1748
        %v1765 = vpack.c.b16 %v1751, %v1750
        %v1766 = vpack.c.b16 %v1753, %v1752
        %v1767 = vpack.c.b16 %v1755, %v1754
        %v1768 = vpack.c.b16 %v1757, %v1756
        %v1769 = vpack.c.b16 %v1759, %v1758
        %v1770 = vpack.c.b16 %v1761, %v1760
        %v1771 = vpack.c.b16 %v1763, %v1762
        %1780 = vmatprep.subr.bf16.mxu0 0
        %1781 = vmatpush1.bf16.msra.mxu0 %v1764
        %1782 = vmatprep.subr.bf16.mxu0 0
        %1783 = vmatpush1.bf16.msra.mxu0 %v1765
        %1784 = vmatprep.subr.bf16.mxu0 0
        %1785 = vmatpush1.bf16.msra.mxu0 %v1766
        %1786 = vmatprep.subr.bf16.mxu0 0
        %1787 = vmatpush1.bf16.msra.mxu0 %v1767
        %1788 = vmatprep.subr.bf16.mxu0 0
        %1789 = vmatpush1.bf16.msra.mxu0 %v1768
        %1790 = vmatprep.subr.bf16.mxu0 0
        %1791 = vmatpush1.bf16.msra.mxu0 %v1769
        %1792 = vmatprep.subr.bf16.mxu0 0
        %1793 = vmatpush1.bf16.msra.mxu0 %v1770
        %1794 = vmatprep.subr.bf16.mxu0 0
        %1795 = vmatpush1.bf16.msra.mxu0 %v1771
        %1796 = vmatprep.subr.bf16.mxu0 0
        %1797 = vmatpush1.bf16.msra.mxu0 0
        %1798 = vmatprep.subr.bf16.mxu0 0
        %1799 = vmatpush1.bf16.msra.mxu0 0
        %1800 = vmatprep.subr.bf16.mxu0 0
        %1801 = vmatpush1.bf16.msra.mxu0 0
        %1802 = vmatprep.subr.bf16.mxu0 0
        %1803 = vmatpush1.bf16.msra.mxu0 0
        %1804 = vmatprep.subr.bf16.mxu0 0
        %1805 = vmatpush1.bf16.msra.mxu0 0
        %1806 = vmatprep.subr.bf16.mxu0 0
        %1807 = vmatpush1.bf16.msra.mxu0 0
        %1808 = vmatprep.subr.bf16.mxu0 0
        %1809 = vmatpush1.bf16.msra.mxu0 0
        %1810 = vmatprep.subr.bf16.mxu0 0
        %1811 = vmatpush1.bf16.msra.mxu0 0
        %1812 = vmatprep.mubr.bf16.mxu0 0
        %1813 = vmatmul.mubr.bf16.gmra.mrb[0].mxu0 %v1713
        %v1814 = vpop.f32.mrb[0].mxu0
        %v1815 = vadd.f32 %v1731, %v1814
        %v1816 = vpop.f32.mrb[0].mxu0
        %v1817 = vpop.f32.mrb[0].mxu0
        %v1818 = vpop.f32.mrb[0].mxu0
        %1819 = vdwg.mxu0
        %v1820 = vmax.f32 %v1815, 0.0
        %v1821 = vpack.c.bf16 %v1820, %v1820
        %v1822 = vld [vmem:[%s8] sm:$0xf]
        %v1823 = vld [vmem:[%s8 + $0x4] sm:$0xf]
        %v1824 = vld [vmem:[%s8 + $0x8] sm:$0xf]
        %v1825 = vld [vmem:[%s13 + $0x7] ss:$0 sm:$0xff]
        %v1829 = vunpack.c.l.b16 %v1822
        %v1830 = vunpack.c.l.b16 %v1823
        %v1831 = vunpack.c.l.b16 %v1824
        %v1832 = vpack.c.b16 %v1830, %v1829
        %v1833 = vpack.c.b16 %v1831, %v1831
        %v1836 = vsel %vm1665, %v1821, 0
        %v1839 = vsel %vm1669, %v1833, 0
        %1841 = vmatprep.subr.bf16.mxu0 0
        %1842 = vmatpush1.bf16.msra.mxu0 %v1832
        %1843 = vmatprep.subr.bf16.mxu0 0
        %1844 = vmatpush1.bf16.msra.mxu0 %v1839
        %1845 = vmatprep.subr.bf16.mxu0 0
        %1846 = vmatpush1.bf16.msra.mxu0 0
        %1847 = vmatprep.subr.bf16.mxu0 0
        %1848 = vmatpush1.bf16.msra.mxu0 0
        %1849 = vmatprep.subr.bf16.mxu0 0
        %1850 = vmatpush1.bf16.msra.mxu0 0
        %1851 = vmatprep.subr.bf16.mxu0 0
        %1852 = vmatpush1.bf16.msra.mxu0 0
        %1853 = vmatprep.subr.bf16.mxu0 0
        %1854 = vmatpush1.bf16.msra.mxu0 0
        %1855 = vmatprep.subr.bf16.mxu0 0
        %1856 = vmatpush1.bf16.msra.mxu0 0
        %1857 = vmatprep.subr.bf16.mxu0 0
        %1858 = vmatpush1.bf16.msra.mxu0 0
        %1859 = vmatprep.subr.bf16.mxu0 0
        %1860 = vmatpush1.bf16.msra.mxu0 0
        %1861 = vmatprep.subr.bf16.mxu0 0
        %1862 = vmatpush1.bf16.msra.mxu0 0
        %1863 = vmatprep.subr.bf16.mxu0 0
        %1864 = vmatpush1.bf16.msra.mxu0 0
        %1865 = vmatprep.subr.bf16.mxu0 0
        %1866 = vmatpush1.bf16.msra.mxu0 0
        %1867 = vmatprep.subr.bf16.mxu0 0
        %1868 = vmatpush1.bf16.msra.mxu0 0
        %1869 = vmatprep.subr.bf16.mxu0 0
        %1870 = vmatpush1.bf16.msra.mxu0 0
        %1871 = vmatprep.subr.bf16.mxu0 0
        %1872 = vmatpush1.bf16.msra.mxu0 0
        %1873 = vmatprep.mubr.bf16.mxu0 0
        %1874 = vmatmul.mubr.bf16.gmra.mrb[0].mxu0 %v1836
        %v1875 = vpop.f32.mrb[0].mxu0
        %v1876 = vadd.f32 %v1825, %v1875
        %v1877 = vpop.f32.mrb[0].mxu0
        %v1878 = vpop.f32.mrb[0].mxu0
        %v1879 = vpop.f32.mrb[0].mxu0
        %1880 = vdwg.mxu0
        %v1881 = vmax.f32 %v1876, 0.0
        %v1882 = vpack.c.bf16 %v1881, %v1881
        %v1883 = vld [vmem:[%s9] sm:$0xf]
        %v1884 = vld [vmem:[%s9 + $0x4] sm:$0xf]
        %v1885 = vld [vmem:[%s9 + $0x8] sm:$0xf]
        %v1886 = vld [vmem:[%s9 + $0xc] sm:$0xf]
        %v1887 = vld [vmem:[%s13 + $0x30] ss:$0 sm:$0xff]
        %v1892 = vunpack.c.l.b16 %v1883
        %v1893 = vunpack.c.l.b16 %v1884
        %v1894 = vunpack.c.l.b16 %v1885
        %v1895 = vunpack.c.l.b16 %v1886
        %v1896 = vpack.c.b16 %v1893, %v1892
        %v1897 = vpack.c.b16 %v1895, %v1894
        %v1901 = vsel %vm1606, %v1882, 0
        %1903 = vmatprep.subr.bf16.mxu0 0
        %1904 = vmatpush1.bf16.msra.mxu0 %v1896
        %1905 = vmatprep.subr.bf16.mxu0 0
        %1906 = vmatpush1.bf16.msra.mxu0 %v1897
        %1907 = vmatprep.subr.bf16.mxu0 0
        %1908 = vmatpush1.bf16.msra.mxu0 0
        %1909 = vmatprep.subr.bf16.mxu0 0
        %1910 = vmatpush1.bf16.msra.mxu0 0
        %1911 = vmatprep.subr.bf16.mxu0 0
        %1912 = vmatpush1.bf16.msra.mxu0 0
        %1913 = vmatprep.subr.bf16.mxu0 0
        %1914 = vmatpush1.bf16.msra.mxu0 0
        %1915 = vmatprep.subr.bf16.mxu0 0
        %1916 = vmatpush1.bf16.msra.mxu0 0
        %1917 = vmatprep.subr.bf16.mxu0 0
        %1918 = vmatpush1.bf16.msra.mxu0 0
        %1919 = vmatprep.subr.bf16.mxu0 0
        %1920 = vmatpush1.bf16.msra.mxu0 0
        %1921 = vmatprep.subr.bf16.mxu0 0
        %1922 = vmatpush1.bf16.msra.mxu0 0
        %1923 = vmatprep.subr.bf16.mxu0 0
        %1924 = vmatpush1.bf16.msra.mxu0 0
        %1925 = vmatprep.subr.bf16.mxu0 0
        %1926 = vmatpush1.bf16.msra.mxu0 0
        %1927 = vmatprep.subr.bf16.mxu0 0
        %1928 = vmatpush1.bf16.msra.mxu0 0
        %1929 = vmatprep.subr.bf16.mxu0 0
        %1930 = vmatpush1.bf16.msra.mxu0 0
        %1931 = vmatprep.subr.bf16.mxu0 0
        %1932 = vmatpush1.bf16.msra.mxu0 0
        %1933 = vmatprep.subr.bf16.mxu0 0
        %1934 = vmatpush1.bf16.msra.mxu0 0
        %1935 = vmatprep.mubr.bf16.mxu0 0
        %1936 = vmatmul.mubr.bf16.gmra.mrb[0].mxu0 %v1901
        %v1937 = vpop.f32.mrb[0].mxu0
        %v1938 = vadd.f32 %v1887, %v1937
        %v1939 = vpop.f32.mrb[0].mxu0
        %v1940 = vpop.f32.mrb[0].mxu0
        %v1941 = vpop.f32.mrb[0].mxu0
        %1942 = vdwg.mxu0
        %v1943 = vmax.f32 %v1938, 0.0
        %v1944 = vpack.c.bf16 %v1943, %v1943
        %v1945 = vld [vmem:[%s10] sm:$0xf]
        %v1946 = vld [vmem:[%s10 + $0x4] sm:$0xf]
        %v1947 = vld [vmem:[%s10 + $0x8] sm:$0xf]
        %v1948 = vld [vmem:[%s10 + $0xc] sm:$0xf]
        %v1949 = vld [vmem:[%s10 + $0x10] sm:$0xf]
        %v1950 = vld [vmem:[%s10 + $0x14] sm:$0xf]
        %v1951 = vld [vmem:[%s10 + $0x18] sm:$0xf]
        %v1952 = vld [vmem:[%s10 + $0x1c] sm:$0xf]
        %v1953 = vld [vmem:[%s13 + $0x31] ss:$0 sm:$0xff]
        %v1962 = vunpack.c.l.b16 %v1945
        %v1963 = vunpack.c.l.b16 %v1946
        %v1964 = vunpack.c.l.b16 %v1947
        %v1965 = vunpack.c.l.b16 %v1948
        %v1966 = vunpack.c.l.b16 %v1949
        %v1967 = vunpack.c.l.b16 %v1950
        %v1968 = vunpack.c.l.b16 %v1951
        %v1969 = vunpack.c.l.b16 %v1952
        %v1970 = vpack.c.b16 %v1963, %v1962
        %v1971 = vpack.c.b16 %v1965, %v1964
        %v1972 = vpack.c.b16 %v1967, %v1966
        %v1973 = vpack.c.b16 %v1969, %v1968
        %v1979 = vsel %vm1543, %v1944, 0
        %1981 = vmatprep.subr.bf16.mxu0 0
        %1982 = vmatpush1.bf16.msra.mxu0 %v1970
        %1983 = vmatprep.subr.bf16.mxu0 0
        %1984 = vmatpush1.bf16.msra.mxu0 %v1971
        %1985 = vmatprep.subr.bf16.mxu0 0
        %1986 = vmatpush1.bf16.msra.mxu0 %v1972
        %1987 = vmatprep.subr.bf16.mxu0 0
        %1988 = vmatpush1.bf16.msra.mxu0 %v1973
        %1989 = vmatprep.subr.bf16.mxu0 0
        %1990 = vmatpush1.bf16.msra.mxu0 0
        %1991 = vmatprep.subr.bf16.mxu0 0
        %1992 = vmatpush1.bf16.msra.mxu0 0
        %1993 = vmatprep.subr.bf16.mxu0 0
        %1994 = vmatpush1.bf16.msra.mxu0 0
        %1995 = vmatprep.subr.bf16.mxu0 0
        %1996 = vmatpush1.bf16.msra.mxu0 0
        %1997 = vmatprep.subr.bf16.mxu0 0
        %1998 = vmatpush1.bf16.msra.mxu0 0
        %1999 = vmatprep.subr.bf16.mxu0 0
        %2000 = vmatpush1.bf16.msra.mxu0 0
        %2001 = vmatprep.subr.bf16.mxu0 0
        %2002 = vmatpush1.bf16.msra.mxu0 0
        %2003 = vmatprep.subr.bf16.mxu0 0
        %2004 = vmatpush1.bf16.msra.mxu0 0
        %2005 = vmatprep.subr.bf16.mxu0 0
        %2006 = vmatpush1.bf16.msra.mxu0 0
        %2007 = vmatprep.subr.bf16.mxu0 0
        %2008 = vmatpush1.bf16.msra.mxu0 0
        %2009 = vmatprep.subr.bf16.mxu0 0
        %2010 = vmatpush1.bf16.msra.mxu0 0
        %2011 = vmatprep.subr.bf16.mxu0 0
        %2012 = vmatpush1.bf16.msra.mxu0 0
        %2013 = vmatprep.mubr.bf16.mxu0 0
        %2014 = vmatmul.mubr.bf16.gmra.mrb[0].mxu0 %v1979
        %v2015 = vpop.f32.mrb[0].mxu0
        %v2016 = vadd.f32 %v1953, %v2015
        %v2017 = vpop.f32.mrb[0].mxu0
        %v2018 = vpop.f32.mrb[0].mxu0
        %v2019 = vpop.f32.mrb[0].mxu0
        %2020 = vdwg.mxu0
        %v2021 = vmax.f32 %v2016, 0.0
        %v2022 = vpack.c.bf16 %v2021, %v2021
        %v2023 = vld [vmem:[%s11] sm:$0xff]
        %v2024 = vld [vmem:[%s11 + $0x8] sm:$0xff]
        %v2025 = vld [vmem:[%s11 + $0x10] sm:$0xff]
        %v2026 = vld [vmem:[%s11 + $0x18] sm:$0xff]
        %v2027 = vld [vmem:[%s11 + $0x20] sm:$0xff]
        %v2028 = vld [vmem:[%s11 + $0x28] sm:$0xff]
        %v2029 = vld [vmem:[%s11 + $0x30] sm:$0xff]
        %v2030 = vld [vmem:[%s11 + $0x38] sm:$0xff]
        %v2031 = vld [vmem:[%s11 + $0x40] sm:$0xff]
        %v2032 = vld [vmem:[%s11 + $0x48] sm:$0xff]
        %v2033 = vld [vmem:[%s11 + $0x50] sm:$0xff]
        %v2034 = vld [vmem:[%s11 + $0x58] sm:$0xff]
        %v2035 = vld [vmem:[%s11 + $0x60] sm:$0xff]
        %v2036 = vld [vmem:[%s11 + $0x68] sm:$0xff]
        %v2037 = vld [vmem:[%s11 + $0x70] sm:$0xff]
        %v2038 = vld [vmem:[%s11 + $0x78] sm:$0xff]
        %s2039 = scalar_lea.vmem %s13, 50
        %v2040 = vld [vmem:[%s2039] ss:$8 sm:$0x3]
        %v2042 = vlaneseq
        %v2043 = vshrl.u32 %v2042, 7
        %v2044 = vsub.s32 0, %v2043
        %v2045 = vrot.slane %v2040, %v2044
        %v2046 = vlaneseq
        %v2047 = vshrl.u32 %v2046, 7
        %v2048 = vsub.s32 1, %v2047
        %v2049 = vrot.slane %v2040, %v2048
        %v2068 = vunpack.c.l.b16 %v2023
        %v2069 = vunpack.c.h.b16 %v2023
        %v2070 = vunpack.c.l.b16 %v2024
        %v2071 = vunpack.c.h.b16 %v2024
        %v2072 = vunpack.c.l.b16 %v2025
        %v2073 = vunpack.c.h.b16 %v2025
        %v2074 = vunpack.c.l.b16 %v2026
        %v2075 = vunpack.c.h.b16 %v2026
        %v2076 = vunpack.c.l.b16 %v2027
        %v2077 = vunpack.c.h.b16 %v2027
        %v2078 = vunpack.c.l.b16 %v2028
        %v2079 = vunpack.c.h.b16 %v2028
        %v2080 = vunpack.c.l.b16 %v2029
        %v2081 = vunpack.c.h.b16 %v2029
        %v2082 = vunpack.c.l.b16 %v2030
        %v2083 = vunpack.c.h.b16 %v2030
        %v2084 = vunpack.c.l.b16 %v2031
        %v2085 = vunpack.c.h.b16 %v2031
        %v2086 = vunpack.c.l.b16 %v2032
        %v2087 = vunpack.c.h.b16 %v2032
        %v2088 = vunpack.c.l.b16 %v2033
        %v2089 = vunpack.c.h.b16 %v2033
        %v2090 = vunpack.c.l.b16 %v2034
        %v2091 = vunpack.c.h.b16 %v2034
        %v2092 = vunpack.c.l.b16 %v2035
        %v2093 = vunpack.c.h.b16 %v2035
        %v2094 = vunpack.c.l.b16 %v2036
        %v2095 = vunpack.c.h.b16 %v2036
        %v2096 = vunpack.c.l.b16 %v2037
        %v2097 = vunpack.c.h.b16 %v2037
        %v2098 = vunpack.c.l.b16 %v2038
        %v2099 = vunpack.c.h.b16 %v2038
        %v2100 = vpack.c.b16 %v2070, %v2068
        %v2101 = vpack.c.b16 %v2071, %v2069
        %v2102 = vpack.c.b16 %v2074, %v2072
        %v2103 = vpack.c.b16 %v2075, %v2073
        %v2104 = vpack.c.b16 %v2078, %v2076
        %v2105 = vpack.c.b16 %v2079, %v2077
        %v2106 = vpack.c.b16 %v2082, %v2080
        %v2107 = vpack.c.b16 %v2083, %v2081
        %v2108 = vpack.c.b16 %v2086, %v2084
        %v2109 = vpack.c.b16 %v2087, %v2085
        %v2110 = vpack.c.b16 %v2090, %v2088
        %v2111 = vpack.c.b16 %v2091, %v2089
        %v2112 = vpack.c.b16 %v2094, %v2092
        %v2113 = vpack.c.b16 %v2095, %v2093
        %v2114 = vpack.c.b16 %v2098, %v2096
        %v2115 = vpack.c.b16 %v2099, %v2097
        %2132 = vmatprep.subr.bf16.mxu0 %v2101
        %2133 = vmatpush1.bf16.msra.mxu0 %v2100
        %2134 = vmatprep.subr.bf16.mxu0 %v2103
        %2135 = vmatpush1.bf16.msra.mxu0 %v2102
        %2136 = vmatprep.subr.bf16.mxu0 %v2105
        %2137 = vmatpush1.bf16.msra.mxu0 %v2104
        %2138 = vmatprep.subr.bf16.mxu0 %v2107
        %2139 = vmatpush1.bf16.msra.mxu0 %v2106
        %2140 = vmatprep.subr.bf16.mxu0 %v2109
        %2141 = vmatpush1.bf16.msra.mxu0 %v2108
        %2142 = vmatprep.subr.bf16.mxu0 %v2111
        %2143 = vmatpush1.bf16.msra.mxu0 %v2110
        %2144 = vmatprep.subr.bf16.mxu0 %v2113
        %2145 = vmatpush1.bf16.msra.mxu0 %v2112
        %2146 = vmatprep.subr.bf16.mxu0 %v2115
        %2147 = vmatpush1.bf16.msra.mxu0 %v2114
        %2148 = vmatprep.subr.bf16.mxu0 0
        %2149 = vmatpush1.bf16.msra.mxu0 0
        %2150 = vmatprep.subr.bf16.mxu0 0
        %2151 = vmatpush1.bf16.msra.mxu0 0
        %2152 = vmatprep.subr.bf16.mxu0 0
        %2153 = vmatpush1.bf16.msra.mxu0 0
        %2154 = vmatprep.subr.bf16.mxu0 0
        %2155 = vmatpush1.bf16.msra.mxu0 0
        %2156 = vmatprep.subr.bf16.mxu0 0
        %2157 = vmatpush1.bf16.msra.mxu0 0
        %2158 = vmatprep.subr.bf16.mxu0 0
        %2159 = vmatpush1.bf16.msra.mxu0 0
        %2160 = vmatprep.subr.bf16.mxu0 0
        %2161 = vmatpush1.bf16.msra.mxu0 0
        %2162 = vmatprep.subr.bf16.mxu0 0
        %2163 = vmatpush1.bf16.msra.mxu0 0
        %2164 = vmatprep.mubr.bf16.mxu0 0
        %2165 = vmatmul.mubr.bf16.gmra.mrb[0].mxu0 %v2022
        %v2166 = vpop.f32.mrb[0].mxu0
        %v2167 = vadd.f32 %v2045, %v2166
        %v2168 = vpop.f32.mrb[0].mxu0
        %v2169 = vadd.f32 %v2049, %v2168
        %v2170 = vpop.f32.mrb[0].mxu0
        %v2171 = vpop.f32.mrb[0].mxu0
        %2172 = vdwg.mxu0
        %v2173 = vmax.f32 %v2167, 0.0
        %v2174 = vmax.f32 %v2169, 0.0
        %v2175 = vpack.c.bf16 %v2173, %v2173
        %v2176 = vpack.c.bf16 %v2174, %v2174
        %v2177 = vld [vmem:[%s12] sm:$0xff]
        %v2178 = vld [vmem:[%s12 + $0x8] sm:$0xff]
        %v2179 = vld [vmem:[%s12 + $0x10] sm:$0xff]
        %v2180 = vld [vmem:[%s12 + $0x18] sm:$0xff]
        %v2181 = vld [vmem:[%s12 + $0x20] sm:$0xff]
        %v2182 = vld [vmem:[%s12 + $0x28] sm:$0xff]
        %v2183 = vld [vmem:[%s12 + $0x30] sm:$0xff]
        %v2184 = vld [vmem:[%s12 + $0x38] sm:$0xff]
        %v2185 = vld [vmem:[%s12 + $0x40] sm:$0xff]
        %v2186 = vld [vmem:[%s12 + $0x48] sm:$0xff]
        %v2187 = vld [vmem:[%s12 + $0x50] sm:$0xff]
        %v2188 = vld [vmem:[%s12 + $0x58] sm:$0xff]
        %v2189 = vld [vmem:[%s12 + $0x60] sm:$0xff]
        %v2190 = vld [vmem:[%s12 + $0x68] sm:$0xff]
        %v2191 = vld [vmem:[%s12 + $0x70] sm:$0xff]
        %v2192 = vld [vmem:[%s12 + $0x78] sm:$0xff]
        %v2193 = vld [vmem:[%s12 + $0x80] sm:$0xff]
        %v2194 = vld [vmem:[%s12 + $0x88] sm:$0xff]
        %v2195 = vld [vmem:[%s12 + $0x90] sm:$0xff]
        %v2196 = vld [vmem:[%s12 + $0x98] sm:$0xff]
        %v2197 = vld [vmem:[%s12 + $0xa0] sm:$0xff]
        %v2198 = vld [vmem:[%s12 + $0xa8] sm:$0xff]
        %v2199 = vld [vmem:[%s12 + $0xb0] sm:$0xff]
        %v2200 = vld [vmem:[%s12 + $0xb8] sm:$0xff]
        %v2201 = vld [vmem:[%s12 + $0xc0] sm:$0xff]
        %v2202 = vld [vmem:[%s12 + $0xc8] sm:$0xff]
        %v2203 = vld [vmem:[%s12 + $0xd0] sm:$0xff]
        %v2204 = vld [vmem:[%s12 + $0xd8] sm:$0xff]
        %v2205 = vld [vmem:[%s12 + $0xe0] sm:$0xff]
        %v2206 = vld [vmem:[%s12 + $0xe8] sm:$0xff]
        %v2207 = vld [vmem:[%s12 + $0xf0] sm:$0xff]
        %v2208 = vld [vmem:[%s12 + $0xf8] sm:$0xff]
        %v2209 = vld [vmem:[%s12 + $0x100] sm:$0xff]
        %v2210 = vld [vmem:[%s12 + $0x108] sm:$0xff]
        %v2211 = vld [vmem:[%s12 + $0x110] sm:$0xff]
        %v2212 = vld [vmem:[%s12 + $0x118] sm:$0xff]
        %v2213 = vld [vmem:[%s12 + $0x120] sm:$0xff]
        %v2214 = vld [vmem:[%s12 + $0x128] sm:$0xff]
        %v2215 = vld [vmem:[%s12 + $0x130] sm:$0xff]
        %v2216 = vld [vmem:[%s12 + $0x138] sm:$0xff]
        %v2217 = vld [vmem:[%s12 + $0x140] sm:$0xff]
        %v2218 = vld [vmem:[%s12 + $0x148] sm:$0xff]
        %v2219 = vld [vmem:[%s12 + $0x150] sm:$0xff]
        %v2220 = vld [vmem:[%s12 + $0x158] sm:$0xff]
        %v2221 = vld [vmem:[%s12 + $0x160] sm:$0xff]
        %v2222 = vld [vmem:[%s12 + $0x168] sm:$0xff]
        %v2223 = vld [vmem:[%s12 + $0x170] sm:$0xff]
        %v2224 = vld [vmem:[%s12 + $0x178] sm:$0xff]
        %v2225 = vld [vmem:[%s12 + $0x180] sm:$0xff]
        %v2226 = vld [vmem:[%s12 + $0x188] sm:$0xff]
        %v2227 = vld [vmem:[%s12 + $0x190] sm:$0xff]
        %v2228 = vld [vmem:[%s12 + $0x198] sm:$0xff]
        %v2229 = vld [vmem:[%s12 + $0x1a0] sm:$0xff]
        %v2230 = vld [vmem:[%s12 + $0x1a8] sm:$0xff]
        %v2231 = vld [vmem:[%s12 + $0x1b0] sm:$0xff]
        %v2232 = vld [vmem:[%s12 + $0x1b8] sm:$0xff]
        %v2233 = vld [vmem:[%s12 + $0x1c0] sm:$0xff]
        %v2234 = vld [vmem:[%s12 + $0x1c8] sm:$0xff]
        %v2235 = vld [vmem:[%s12 + $0x1d0] sm:$0xff]
        %v2236 = vld [vmem:[%s12 + $0x1d8] sm:$0xff]
        %v2237 = vld [vmem:[%s12 + $0x1e0] sm:$0xff]
        %v2238 = vld [vmem:[%s12 + $0x1e8] sm:$0xff]
        %v2239 = vld [vmem:[%s12 + $0x1f0] sm:$0xff]
        %v2240 = vld [vmem:[%s12 + $0x1f8] sm:$0xff]
        %v2241 = vld [vmem:[%s12 + $0x200] sm:$0xff]
        %v2242 = vld [vmem:[%s12 + $0x208] sm:$0xff]
        %v2243 = vld [vmem:[%s12 + $0x210] sm:$0xff]
        %v2244 = vld [vmem:[%s12 + $0x218] sm:$0xff]
        %v2245 = vld [vmem:[%s12 + $0x220] sm:$0xff]
        %v2246 = vld [vmem:[%s12 + $0x228] sm:$0xff]
        %v2247 = vld [vmem:[%s12 + $0x230] sm:$0xff]
        %v2248 = vld [vmem:[%s12 + $0x238] sm:$0xff]
        %v2249 = vld [vmem:[%s12 + $0x240] sm:$0xff]
        %v2250 = vld [vmem:[%s12 + $0x248] sm:$0xff]
        %v2251 = vld [vmem:[%s12 + $0x250] sm:$0xff]
        %v2252 = vld [vmem:[%s12 + $0x258] sm:$0xff]
        %v2253 = vld [vmem:[%s12 + $0x260] sm:$0xff]
        %v2254 = vld [vmem:[%s12 + $0x268] sm:$0xff]
        %v2255 = vld [vmem:[%s12 + $0x270] sm:$0xff]
        %v2256 = vld [vmem:[%s12 + $0x278] sm:$0xff]
        %v2257 = vld [vmem:[%s12 + $0x280] sm:$0xff]
        %v2258 = vld [vmem:[%s12 + $0x288] sm:$0xff]
        %v2259 = vld [vmem:[%s12 + $0x290] sm:$0xff]
        %v2260 = vld [vmem:[%s12 + $0x298] sm:$0xff]
        %v2261 = vld [vmem:[%s12 + $0x2a0] sm:$0xff]
        %v2262 = vld [vmem:[%s12 + $0x2a8] sm:$0xff]
        %v2263 = vld [vmem:[%s12 + $0x2b0] sm:$0xff]
        %v2264 = vld [vmem:[%s12 + $0x2b8] sm:$0xff]
        %v2265 = vld [vmem:[%s12 + $0x2c0] sm:$0xff]
        %v2266 = vld [vmem:[%s12 + $0x2c8] sm:$0xff]
        %v2267 = vld [vmem:[%s12 + $0x2d0] sm:$0xff]
        %v2268 = vld [vmem:[%s12 + $0x2d8] sm:$0xff]
        %v2269 = vld [vmem:[%s12 + $0x2e0] sm:$0xff]
        %v2270 = vld [vmem:[%s12 + $0x2e8] sm:$0xff]
        %v2271 = vld [vmem:[%s12 + $0x2f0] sm:$0xff]
        %v2272 = vld [vmem:[%s12 + $0x2f8] sm:$0xff]
        %s2273 = scalar_lea.vmem %s13, 51
        %v2274 = vld [vmem:[%s2273] ss:$8 sm:$0xf]
        %v2275 = vld [vmem:[%s2273] ss:$8 sm:$0x30]
        %v2276 = vor.u32 %v2274, %v2275
        %v2278 = vlaneseq
        %v2279 = vshrl.u32 %v2278, 7
        %v2280 = vsub.s32 0, %v2279
        %v2281 = vrot.slane %v2276, %v2280
        %v2282 = vlaneseq
        %v2283 = vshrl.u32 %v2282, 7
        %v2284 = vsub.s32 1, %v2283
        %v2285 = vrot.slane %v2276, %v2284
        %v2286 = vlaneseq
        %v2287 = vshrl.u32 %v2286, 7
        %v2288 = vsub.s32 2, %v2287
        %v2289 = vrot.slane %v2276, %v2288
        %v2290 = vlaneseq
        %v2291 = vshrl.u32 %v2290, 7
        %v2292 = vsub.s32 3, %v2291
        %v2293 = vrot.slane %v2276, %v2292
        %v2294 = vlaneseq
        %v2295 = vshrl.u32 %v2294, 7
        %v2296 = vsub.s32 4, %v2295
        %v2297 = vrot.slane %v2276, %v2296
        %v2298 = vlaneseq
        %v2299 = vshrl.u32 %v2298, 7
        %v2300 = vsub.s32 5, %v2299
        %v2301 = vrot.slane %v2276, %v2300
        %v2404 = vunpack.c.l.b16 %v2177
        %v2405 = vunpack.c.h.b16 %v2177
        %v2406 = vunpack.c.l.b16 %v2178
        %v2407 = vunpack.c.h.b16 %v2178
        %v2408 = vunpack.c.l.b16 %v2179
        %v2409 = vunpack.c.h.b16 %v2179
        %v2410 = vunpack.c.l.b16 %v2180
        %v2411 = vunpack.c.h.b16 %v2180
        %v2412 = vunpack.c.l.b16 %v2181
        %v2413 = vunpack.c.h.b16 %v2181
        %v2414 = vunpack.c.l.b16 %v2182
        %v2415 = vunpack.c.h.b16 %v2182
        %v2416 = vunpack.c.l.b16 %v2183
        %v2417 = vunpack.c.h.b16 %v2183
        %v2418 = vunpack.c.l.b16 %v2184
        %v2419 = vunpack.c.h.b16 %v2184
        %v2420 = vunpack.c.l.b16 %v2185
        %v2421 = vunpack.c.h.b16 %v2185
        %v2422 = vunpack.c.l.b16 %v2186
        %v2423 = vunpack.c.h.b16 %v2186
        %v2424 = vunpack.c.l.b16 %v2187
        %v2425 = vunpack.c.h.b16 %v2187
        %v2426 = vunpack.c.l.b16 %v2188
        %v2427 = vunpack.c.h.b16 %v2188
        %v2428 = vunpack.c.l.b16 %v2189
        %v2429 = vunpack.c.h.b16 %v2189
        %v2430 = vunpack.c.l.b16 %v2190
        %v2431 = vunpack.c.h.b16 %v2190
        %v2432 = vunpack.c.l.b16 %v2191
        %v2433 = vunpack.c.h.b16 %v2191
        %v2434 = vunpack.c.l.b16 %v2192
        %v2435 = vunpack.c.h.b16 %v2192
        %v2436 = vunpack.c.l.b16 %v2193
        %v2437 = vunpack.c.h.b16 %v2193
        %v2438 = vunpack.c.l.b16 %v2194
        %v2439 = vunpack.c.h.b16 %v2194
        %v2440 = vunpack.c.l.b16 %v2195
        %v2441 = vunpack.c.h.b16 %v2195
        %v2442 = vunpack.c.l.b16 %v2196
        %v2443 = vunpack.c.h.b16 %v2196
        %v2444 = vunpack.c.l.b16 %v2197
        %v2445 = vunpack.c.h.b16 %v2197
        %v2446 = vunpack.c.l.b16 %v2198
        %v2447 = vunpack.c.h.b16 %v2198
        %v2448 = vunpack.c.l.b16 %v2199
        %v2449 = vunpack.c.h.b16 %v2199
        %v2450 = vunpack.c.l.b16 %v2200
        %v2451 = vunpack.c.h.b16 %v2200
        %v2452 = vunpack.c.l.b16 %v2201
        %v2453 = vunpack.c.h.b16 %v2201
        %v2454 = vunpack.c.l.b16 %v2202
        %v2455 = vunpack.c.h.b16 %v2202
        %v2456 = vunpack.c.l.b16 %v2203
        %v2457 = vunpack.c.h.b16 %v2203
        %v2458 = vunpack.c.l.b16 %v2204
        %v2459 = vunpack.c.h.b16 %v2204
        %v2460 = vunpack.c.l.b16 %v2205
        %v2461 = vunpack.c.h.b16 %v2205
        %v2462 = vunpack.c.l.b16 %v2206
        %v2463 = vunpack.c.h.b16 %v2206
        %v2464 = vunpack.c.l.b16 %v2207
        %v2465 = vunpack.c.h.b16 %v2207
        %v2466 = vunpack.c.l.b16 %v2208
        %v2467 = vunpack.c.h.b16 %v2208
        %v2468 = vunpack.c.l.b16 %v2209
        %v2469 = vunpack.c.h.b16 %v2209
        %v2470 = vunpack.c.l.b16 %v2210
        %v2471 = vunpack.c.h.b16 %v2210
        %v2472 = vunpack.c.l.b16 %v2211
        %v2473 = vunpack.c.h.b16 %v2211
        %v2474 = vunpack.c.l.b16 %v2212
        %v2475 = vunpack.c.h.b16 %v2212
        %v2476 = vunpack.c.l.b16 %v2213
        %v2477 = vunpack.c.h.b16 %v2213
        %v2478 = vunpack.c.l.b16 %v2214
        %v2479 = vunpack.c.h.b16 %v2214
        %v2480 = vunpack.c.l.b16 %v2215
        %v2481 = vunpack.c.h.b16 %v2215
        %v2482 = vunpack.c.l.b16 %v2216
        %v2483 = vunpack.c.h.b16 %v2216
        %v2484 = vunpack.c.l.b16 %v2217
        %v2485 = vunpack.c.h.b16 %v2217
        %v2486 = vunpack.c.l.b16 %v2218
        %v2487 = vunpack.c.h.b16 %v2218
        %v2488 = vunpack.c.l.b16 %v2219
        %v2489 = vunpack.c.h.b16 %v2219
        %v2490 = vunpack.c.l.b16 %v2220
        %v2491 = vunpack.c.h.b16 %v2220
        %v2492 = vunpack.c.l.b16 %v2221
        %v2493 = vunpack.c.h.b16 %v2221
        %v2494 = vunpack.c.l.b16 %v2222
        %v2495 = vunpack.c.h.b16 %v2222
        %v2496 = vunpack.c.l.b16 %v2223
        %v2497 = vunpack.c.h.b16 %v2223
        %v2498 = vunpack.c.l.b16 %v2224
        %v2499 = vunpack.c.h.b16 %v2224
        %v2500 = vunpack.c.l.b16 %v2225
        %v2501 = vunpack.c.h.b16 %v2225
        %v2502 = vunpack.c.l.b16 %v2226
        %v2503 = vunpack.c.h.b16 %v2226
        %v2504 = vunpack.c.l.b16 %v2227
        %v2505 = vunpack.c.h.b16 %v2227
        %v2506 = vunpack.c.l.b16 %v2228
        %v2507 = vunpack.c.h.b16 %v2228
        %v2508 = vunpack.c.l.b16 %v2229
        %v2509 = vunpack.c.h.b16 %v2229
        %v2510 = vunpack.c.l.b16 %v2230
        %v2511 = vunpack.c.h.b16 %v2230
        %v2512 = vunpack.c.l.b16 %v2231
        %v2513 = vunpack.c.h.b16 %v2231
        %v2514 = vunpack.c.l.b16 %v2232
        %v2515 = vunpack.c.h.b16 %v2232
        %v2516 = vunpack.c.l.b16 %v2233
        %v2517 = vunpack.c.h.b16 %v2233
        %v2518 = vunpack.c.l.b16 %v2234
        %v2519 = vunpack.c.h.b16 %v2234
        %v2520 = vunpack.c.l.b16 %v2235
        %v2521 = vunpack.c.h.b16 %v2235
        %v2522 = vunpack.c.l.b16 %v2236
        %v2523 = vunpack.c.h.b16 %v2236
        %v2524 = vunpack.c.l.b16 %v2237
        %v2525 = vunpack.c.h.b16 %v2237
        %v2526 = vunpack.c.l.b16 %v2238
        %v2527 = vunpack.c.h.b16 %v2238
        %v2528 = vunpack.c.l.b16 %v2239
        %v2529 = vunpack.c.h.b16 %v2239
        %v2530 = vunpack.c.l.b16 %v2240
        %v2531 = vunpack.c.h.b16 %v2240
        %v2532 = vunpack.c.l.b16 %v2241
        %v2533 = vunpack.c.h.b16 %v2241
        %v2534 = vunpack.c.l.b16 %v2242
        %v2535 = vunpack.c.h.b16 %v2242
        %v2536 = vunpack.c.l.b16 %v2243
        %v2537 = vunpack.c.h.b16 %v2243
        %v2538 = vunpack.c.l.b16 %v2244
        %v2539 = vunpack.c.h.b16 %v2244
        %v2540 = vunpack.c.l.b16 %v2245
        %v2541 = vunpack.c.h.b16 %v2245
        %v2542 = vunpack.c.l.b16 %v2246
        %v2543 = vunpack.c.h.b16 %v2246
        %v2544 = vunpack.c.l.b16 %v2247
        %v2545 = vunpack.c.h.b16 %v2247
        %v2546 = vunpack.c.l.b16 %v2248
        %v2547 = vunpack.c.h.b16 %v2248
        %v2548 = vunpack.c.l.b16 %v2249
        %v2549 = vunpack.c.h.b16 %v2249
        %v2550 = vunpack.c.l.b16 %v2250
        %v2551 = vunpack.c.h.b16 %v2250
        %v2552 = vunpack.c.l.b16 %v2251
        %v2553 = vunpack.c.h.b16 %v2251
        %v2554 = vunpack.c.l.b16 %v2252
        %v2555 = vunpack.c.h.b16 %v2252
        %v2556 = vunpack.c.l.b16 %v2253
        %v2557 = vunpack.c.h.b16 %v2253
        %v2558 = vunpack.c.l.b16 %v2254
        %v2559 = vunpack.c.h.b16 %v2254
        %v2560 = vunpack.c.l.b16 %v2255
        %v2561 = vunpack.c.h.b16 %v2255
        %v2562 = vunpack.c.l.b16 %v2256
        %v2563 = vunpack.c.h.b16 %v2256
        %v2564 = vunpack.c.l.b16 %v2257
        %v2565 = vunpack.c.h.b16 %v2257
        %v2566 = vunpack.c.l.b16 %v2258
        %v2567 = vunpack.c.h.b16 %v2258
        %v2568 = vunpack.c.l.b16 %v2259
        %v2569 = vunpack.c.h.b16 %v2259
        %v2570 = vunpack.c.l.b16 %v2260
        %v2571 = vunpack.c.h.b16 %v2260
        %v2572 = vunpack.c.l.b16 %v2261
        %v2573 = vunpack.c.h.b16 %v2261
        %v2574 = vunpack.c.l.b16 %v2262
        %v2575 = vunpack.c.h.b16 %v2262
        %v2576 = vunpack.c.l.b16 %v2263
        %v2577 = vunpack.c.h.b16 %v2263
        %v2578 = vunpack.c.l.b16 %v2264
        %v2579 = vunpack.c.h.b16 %v2264
        %v2580 = vunpack.c.l.b16 %v2265
        %v2581 = vunpack.c.h.b16 %v2265
        %v2582 = vunpack.c.l.b16 %v2266
        %v2583 = vunpack.c.h.b16 %v2266
        %v2584 = vunpack.c.l.b16 %v2267
        %v2585 = vunpack.c.h.b16 %v2267
        %v2586 = vunpack.c.l.b16 %v2268
        %v2587 = vunpack.c.h.b16 %v2268
        %v2588 = vunpack.c.l.b16 %v2269
        %v2589 = vunpack.c.h.b16 %v2269
        %v2590 = vunpack.c.l.b16 %v2270
        %v2591 = vunpack.c.h.b16 %v2270
        %v2592 = vunpack.c.l.b16 %v2271
        %v2593 = vunpack.c.h.b16 %v2271
        %v2594 = vunpack.c.l.b16 %v2272
        %v2595 = vunpack.c.h.b16 %v2272
        %v2596 = vpack.c.b16 %v2410, %v2404
        %v2597 = vpack.c.b16 %v2411, %v2405
        %v2598 = vpack.c.b16 %v2412, %v2406
        %v2599 = vpack.c.b16 %v2413, %v2407
        %v2600 = vpack.c.b16 %v2414, %v2408
        %v2601 = vpack.c.b16 %v2415, %v2409
        %v2602 = vpack.c.b16 %v2422, %v2416
        %v2603 = vpack.c.b16 %v2423, %v2417
        %v2604 = vpack.c.b16 %v2424, %v2418
        %v2605 = vpack.c.b16 %v2425, %v2419
        %v2606 = vpack.c.b16 %v2426, %v2420
        %v2607 = vpack.c.b16 %v2427, %v2421
        %v2608 = vpack.c.b16 %v2434, %v2428
        %v2609 = vpack.c.b16 %v2435, %v2429
        %v2610 = vpack.c.b16 %v2436, %v2430
        %v2611 = vpack.c.b16 %v2437, %v2431
        %v2612 = vpack.c.b16 %v2438, %v2432
        %v2613 = vpack.c.b16 %v2439, %v2433
        %v2614 = vpack.c.b16 %v2446, %v2440
        %v2615 = vpack.c.b16 %v2447, %v2441
        %v2616 = vpack.c.b16 %v2448, %v2442
        %v2617 = vpack.c.b16 %v2449, %v2443
        %v2618 = vpack.c.b16 %v2450, %v2444
        %v2619 = vpack.c.b16 %v2451, %v2445
        %v2620 = vpack.c.b16 %v2458, %v2452
        %v2621 = vpack.c.b16 %v2459, %v2453
        %v2622 = vpack.c.b16 %v2460, %v2454
        %v2623 = vpack.c.b16 %v2461, %v2455
        %v2624 = vpack.c.b16 %v2462, %v2456
        %v2625 = vpack.c.b16 %v2463, %v2457
        %v2626 = vpack.c.b16 %v2470, %v2464
        %v2627 = vpack.c.b16 %v2471, %v2465
        %v2628 = vpack.c.b16 %v2472, %v2466
        %v2629 = vpack.c.b16 %v2473, %v2467
        %v2630 = vpack.c.b16 %v2474, %v2468
        %v2631 = vpack.c.b16 %v2475, %v2469
        %v2632 = vpack.c.b16 %v2482, %v2476
        %v2633 = vpack.c.b16 %v2483, %v2477
        %v2634 = vpack.c.b16 %v2484, %v2478
        %v2635 = vpack.c.b16 %v2485, %v2479
        %v2636 = vpack.c.b16 %v2486, %v2480
        %v2637 = vpack.c.b16 %v2487, %v2481
        %v2638 = vpack.c.b16 %v2494, %v2488
        %v2639 = vpack.c.b16 %v2495, %v2489
        %v2640 = vpack.c.b16 %v2496, %v2490
        %v2641 = vpack.c.b16 %v2497, %v2491
        %v2642 = vpack.c.b16 %v2498, %v2492
        %v2643 = vpack.c.b16 %v2499, %v2493
        %v2644 = vpack.c.b16 %v2506, %v2500
        %v2645 = vpack.c.b16 %v2507, %v2501
        %v2646 = vpack.c.b16 %v2508, %v2502
        %v2647 = vpack.c.b16 %v2509, %v2503
        %v2648 = vpack.c.b16 %v2510, %v2504
        %v2649 = vpack.c.b16 %v2511, %v2505
        %v2650 = vpack.c.b16 %v2518, %v2512
        %v2651 = vpack.c.b16 %v2519, %v2513
        %v2652 = vpack.c.b16 %v2520, %v2514
        %v2653 = vpack.c.b16 %v2521, %v2515
        %v2654 = vpack.c.b16 %v2522, %v2516
        %v2655 = vpack.c.b16 %v2523, %v2517
        %v2656 = vpack.c.b16 %v2530, %v2524
        %v2657 = vpack.c.b16 %v2531, %v2525
        %v2658 = vpack.c.b16 %v2532, %v2526
        %v2659 = vpack.c.b16 %v2533, %v2527
        %v2660 = vpack.c.b16 %v2534, %v2528
        %v2661 = vpack.c.b16 %v2535, %v2529
        %v2662 = vpack.c.b16 %v2542, %v2536
        %v2663 = vpack.c.b16 %v2543, %v2537
        %v2664 = vpack.c.b16 %v2544, %v2538
        %v2665 = vpack.c.b16 %v2545, %v2539
        %v2666 = vpack.c.b16 %v2546, %v2540
        %v2667 = vpack.c.b16 %v2547, %v2541
        %v2668 = vpack.c.b16 %v2554, %v2548
        %v2669 = vpack.c.b16 %v2555, %v2549
        %v2670 = vpack.c.b16 %v2556, %v2550
        %v2671 = vpack.c.b16 %v2557, %v2551
        %v2672 = vpack.c.b16 %v2558, %v2552
        %v2673 = vpack.c.b16 %v2559, %v2553
        %v2674 = vpack.c.b16 %v2566, %v2560
        %v2675 = vpack.c.b16 %v2567, %v2561
        %v2676 = vpack.c.b16 %v2568, %v2562
        %v2677 = vpack.c.b16 %v2569, %v2563
        %v2678 = vpack.c.b16 %v2570, %v2564
        %v2679 = vpack.c.b16 %v2571, %v2565
        %v2680 = vpack.c.b16 %v2578, %v2572
        %v2681 = vpack.c.b16 %v2579, %v2573
        %v2682 = vpack.c.b16 %v2580, %v2574
        %v2683 = vpack.c.b16 %v2581, %v2575
        %v2684 = vpack.c.b16 %v2582, %v2576
        %v2685 = vpack.c.b16 %v2583, %v2577
        %v2686 = vpack.c.b16 %v2590, %v2584
        %v2687 = vpack.c.b16 %v2591, %v2585
        %v2688 = vpack.c.b16 %v2592, %v2586
        %v2689 = vpack.c.b16 %v2593, %v2587
        %v2690 = vpack.c.b16 %v2594, %v2588
        %v2691 = vpack.c.b16 %v2595, %v2589
        %2788 = vmatprep.subr.bf16.mxu0 %v2597
        %2789 = vmatpush1.bf16.msra.mxu0 %v2596
        %2790 = vmatprep.subr.bf16.mxu0 %v2603
        %2791 = vmatpush1.bf16.msra.mxu0 %v2602
        %2792 = vmatprep.subr.bf16.mxu0 %v2609
        %2793 = vmatpush1.bf16.msra.mxu0 %v2608
        %2794 = vmatprep.subr.bf16.mxu0 %v2615
        %2795 = vmatpush1.bf16.msra.mxu0 %v2614
        %2796 = vmatprep.subr.bf16.mxu0 %v2621
        %2797 = vmatpush1.bf16.msra.mxu0 %v2620
        %2798 = vmatprep.subr.bf16.mxu0 %v2627
        %2799 = vmatpush1.bf16.msra.mxu0 %v2626
        %2800 = vmatprep.subr.bf16.mxu0 %v2633
        %2801 = vmatpush1.bf16.msra.mxu0 %v2632
        %2802 = vmatprep.subr.bf16.mxu0 %v2639
        %2803 = vmatpush1.bf16.msra.mxu0 %v2638
        %2804 = vmatprep.subr.bf16.mxu0 %v2645
        %2805 = vmatpush1.bf16.msra.mxu0 %v2644
        %2806 = vmatprep.subr.bf16.mxu0 %v2651
        %2807 = vmatpush1.bf16.msra.mxu0 %v2650
        %2808 = vmatprep.subr.bf16.mxu0 %v2657
        %2809 = vmatpush1.bf16.msra.mxu0 %v2656
        %2810 = vmatprep.subr.bf16.mxu0 %v2663
        %2811 = vmatpush1.bf16.msra.mxu0 %v2662
        %2812 = vmatprep.subr.bf16.mxu0 %v2669
        %2813 = vmatpush1.bf16.msra.mxu0 %v2668
        %2814 = vmatprep.subr.bf16.mxu0 %v2675
        %2815 = vmatpush1.bf16.msra.mxu0 %v2674
        %2816 = vmatprep.subr.bf16.mxu0 %v2681
        %2817 = vmatpush1.bf16.msra.mxu0 %v2680
        %2818 = vmatprep.subr.bf16.mxu0 %v2687
        %2819 = vmatpush1.bf16.msra.mxu0 %v2686
        %2820 = vmatprep.mubr.bf16.mxu0 %v2176
        %2821 = vmatmul.mubr.bf16.gmra.mrb[0].mxu0 %v2175
        %v2822 = vpop.f32.mrb[0].mxu0
        %v2823 = vadd.f32 %v2281, %v2822
        %v2824 = vpop.f32.mrb[0].mxu0
        %v2825 = vadd.f32 %v2285, %v2824
        %v2826 = vpop.f32.mrb[0].mxu0
        %v2827 = vpop.f32.mrb[0].mxu0
        %2828 = vdwg.mxu0
        %2829 = vmatprep.subr.bf16.mxu0 %v2599
        %2830 = vmatpush1.bf16.msra.mxu0 %v2598
        %2831 = vmatprep.subr.bf16.mxu0 %v2605
        %2832 = vmatpush1.bf16.msra.mxu0 %v2604
        %2833 = vmatprep.subr.bf16.mxu0 %v2611
        %2834 = vmatpush1.bf16.msra.mxu0 %v2610
        %2835 = vmatprep.subr.bf16.mxu0 %v2617
        %2836 = vmatpush1.bf16.msra.mxu0 %v2616
        %2837 = vmatprep.subr.bf16.mxu0 %v2623
        %2838 = vmatpush1.bf16.msra.mxu0 %v2622
        %2839 = vmatprep.subr.bf16.mxu0 %v2629
        %2840 = vmatpush1.bf16.msra.mxu0 %v2628
        %2841 = vmatprep.subr.bf16.mxu0 %v2635
        %2842 = vmatpush1.bf16.msra.mxu0 %v2634
        %2843 = vmatprep.subr.bf16.mxu0 %v2641
        %2844 = vmatpush1.bf16.msra.mxu0 %v2640
        %2845 = vmatprep.subr.bf16.mxu0 %v2647
        %2846 = vmatpush1.bf16.msra.mxu0 %v2646
        %2847 = vmatprep.subr.bf16.mxu0 %v2653
        %2848 = vmatpush1.bf16.msra.mxu0 %v2652
        %2849 = vmatprep.subr.bf16.mxu0 %v2659
        %2850 = vmatpush1.bf16.msra.mxu0 %v2658
        %2851 = vmatprep.subr.bf16.mxu0 %v2665
        %2852 = vmatpush1.bf16.msra.mxu0 %v2664
        %2853 = vmatprep.subr.bf16.mxu0 %v2671
        %2854 = vmatpush1.bf16.msra.mxu0 %v2670
        %2855 = vmatprep.subr.bf16.mxu0 %v2677
        %2856 = vmatpush1.bf16.msra.mxu0 %v2676
        %2857 = vmatprep.subr.bf16.mxu0 %v2683
        %2858 = vmatpush1.bf16.msra.mxu0 %v2682
        %2859 = vmatprep.subr.bf16.mxu0 %v2689
        %2860 = vmatpush1.bf16.msra.mxu0 %v2688
        %2861 = vmatprep.mubr.bf16.mxu0 %v2176
        %2862 = vmatmul.mubr.bf16.gmra.mrb[0].mxu0 %v2175
        %v2863 = vpop.f32.mrb[0].mxu0
        %v2864 = vadd.f32 %v2289, %v2863
        %v2865 = vpop.f32.mrb[0].mxu0
        %v2866 = vadd.f32 %v2293, %v2865
        %v2867 = vpop.f32.mrb[0].mxu0
        %v2868 = vpop.f32.mrb[0].mxu0
        %2869 = vdwg.mxu0
        %2870 = vmatprep.subr.bf16.mxu0 %v2601
        %2871 = vmatpush1.bf16.msra.mxu0 %v2600
        %2872 = vmatprep.subr.bf16.mxu0 %v2607
        %2873 = vmatpush1.bf16.msra.mxu0 %v2606
        %2874 = vmatprep.subr.bf16.mxu0 %v2613
        %2875 = vmatpush1.bf16.msra.mxu0 %v2612
        %2876 = vmatprep.subr.bf16.mxu0 %v2619
        %2877 = vmatpush1.bf16.msra.mxu0 %v2618
        %2878 = vmatprep.subr.bf16.mxu0 %v2625
        %2879 = vmatpush1.bf16.msra.mxu0 %v2624
        %2880 = vmatprep.subr.bf16.mxu0 %v2631
        %2881 = vmatpush1.bf16.msra.mxu0 %v2630
        %2882 = vmatprep.subr.bf16.mxu0 %v2637
        %2883 = vmatpush1.bf16.msra.mxu0 %v2636
        %2884 = vmatprep.subr.bf16.mxu0 %v2643
        %2885 = vmatpush1.bf16.msra.mxu0 %v2642
        %2886 = vmatprep.subr.bf16.mxu0 %v2649
        %2887 = vmatpush1.bf16.msra.mxu0 %v2648
        %2888 = vmatprep.subr.bf16.mxu0 %v2655
        %2889 = vmatpush1.bf16.msra.mxu0 %v2654
        %2890 = vmatprep.subr.bf16.mxu0 %v2661
        %2891 = vmatpush1.bf16.msra.mxu0 %v2660
        %2892 = vmatprep.subr.bf16.mxu0 %v2667
        %2893 = vmatpush1.bf16.msra.mxu0 %v2666
        %2894 = vmatprep.subr.bf16.mxu0 %v2673
        %2895 = vmatpush1.bf16.msra.mxu0 %v2672
        %2896 = vmatprep.subr.bf16.mxu0 %v2679
        %2897 = vmatpush1.bf16.msra.mxu0 %v2678
        %2898 = vmatprep.subr.bf16.mxu0 %v2685
        %2899 = vmatpush1.bf16.msra.mxu0 %v2684
        %2900 = vmatprep.subr.bf16.mxu0 %v2691
        %2901 = vmatpush1.bf16.msra.mxu0 %v2690
        %2902 = vmatprep.mubr.bf16.mxu0 %v2176
        %2903 = vmatmul.mubr.bf16.gmra.mrb[0].mxu0 %v2175
        %v2904 = vpop.f32.mrb[0].mxu0
        %v2905 = vadd.f32 %v2297, %v2904
        %v2906 = vpop.f32.mrb[0].mxu0
        %v2907 = vadd.f32 %v2301, %v2906
        %v2908 = vpop.f32.mrb[0].mxu0
        %v2909 = vpop.f32.mrb[0].mxu0
        %2910 = vdwg.mxu0
        %v2911 = vtanh.pop %v2823
        %v2912 = vtanh.pop %v2825
        %v2913 = vtanh.pop %v2864
        %v2914 = vtanh.pop %v2866
        %v2915 = vtanh.pop %v2905
        %v2916 = vtanh.pop %v2907
        %v2917 = vpack.c.bf16 %v2911, %v2911
        %v2918 = vpack.c.bf16 %v2912, %v2912
        %v2919 = vpack.c.bf16 %v2913, %v2913
        %v2920 = vpack.c.bf16 %v2914, %v2914
        %v2921 = vpack.c.bf16 %v2915, %v2915
        %v2922 = vpack.c.bf16 %v2916, %v2916
        %v2929 = vunpack.c.l.b16 %v2917
        %v2930 = vunpack.c.l.b16 %v2918
        %v2931 = vunpack.c.l.b16 %v2919
        %v2932 = vunpack.c.l.b16 %v2920
        %v2933 = vunpack.c.l.b16 %v2921
        %v2934 = vunpack.c.l.b16 %v2922
        %v2935 = vpack.c.b16 %v2930, %v2929
        %v2936 = vpack.c.b16 %v2932, %v2931
        %v2937 = vpack.c.b16 %v2934, %v2933
        %2941 = vst [vmem:[%s494] sm:$0xff] %v2935
        %2942 = vst [vmem:[%s494 + $0x8] sm:$0xff] %v2936
        %2943 = vst [vmem:[%s494 + $0x10] sm:$0xff] %v2937
        %p2944 = scmp.lt.s32.totalorder %s30, 1
        %s2945 = scalar_select %p2944, %s30, 1
        %s2946 = smul.addr %s2945, 4
        %s2947 = scalar_lea.vmem %s14, %s2946
        %s2948 = sand.u32 %s363, 1
        %s2949 = scalar_lea.sflag [#allocation3], %s2948
        %s2950 = sand.u32 %s363, 1
        %s2951 = smul.addr %s2950, 24
        %s2952 = scalar_lea.vmem [#allocation2], %s2951
        // Predicated region
        $region77: #{autoencoder_forward.1} parent=75 // pred_check
          %p2953 = pneg %p347
        $region78: #{autoencoder_forward.1} parent=75 // pred_check_branch
          %2955 = sbr.rel (%p2953) target = $region80
        $region79: #{autoencoder_forward.1} parent=75 // pred_region
          _
        $region80: #{autoencoder_forward.1} parent=75 // pred_fallthru
          _
        // Predicated region
        $region81: #{autoencoder_forward.1} parent=75 // pred_check
          %p2956 = pneg %p373
        $region82: #{autoencoder_forward.1} parent=75 // pred_check_branch
          %2958 = sbr.rel (%p2956) target = $region84
        $region83: #{autoencoder_forward.1} parent=75 // pred_region
          %s2960 = ssub.s32 384, 384
          %2961 = vsyncadd %s2949, %s2960
          %s2962 = smul.addr %s30, 6
          %s2963 = smul.addr %s2962, 64
          %s2964 = scalar_lea.hbm %s15, %s2963
          %s2966 = sshll.u32 %s2952, 4
          %s2967 = int_to_ptr.vmem [resolvable:$true] %s2966
          %2969 = dma.vmem_to_hbm [thread:$0]  %s2967, 384, %s2964, %s2949
        $region84: #{autoencoder_forward.1} parent=75 // pred_fallthru
          _
      $region76: #{autoencoder_forward.1} parent=5 // pred_fallthru
        _
      %p2970 = scmp.le.s32.totalorder 2, %s25
      // Predicated region
      $region85: #{autoencoder_forward.1} parent=5 // pred_check
        %p2971 = pneg %p2970
      $region86: #{autoencoder_forward.1} parent=5 // pred_check_branch
        %2973 = sbr.rel (%p2971) target = $region88
      $region87: #{autoencoder_forward.1} parent=5 // pred_region
        %s2974 = ssub.s32 %s25, 2
        // Predicated region
        $region89: #{autoencoder_forward.1} parent=87 // pred_check
          %p2975 = pneg %p353
        $region90: #{autoencoder_forward.1} parent=87 // pred_check_branch
          %2977 = sbr.rel (%p2975) target = $region92
        $region91: #{autoencoder_forward.1} parent=87 // pred_region
          %p2978 = scmp.lt.s32.totalorder %s31, 1
          %s2979 = scalar_select %p2978, %s31, 1
          %s2980 = smul.addr %s2979, 4
          %s2981 = scalar_lea.vmem %s14, %s2980
        $region92: #{autoencoder_forward.1} parent=87 // pred_fallthru
          _
        // Predicated region
        $region93: #{autoencoder_forward.1} parent=87 // pred_check
          %p2982 = pneg %p379
        $region94: #{autoencoder_forward.1} parent=87 // pred_check_branch
          %2984 = sbr.rel (%p2982) target = $region96
        $region95: #{autoencoder_forward.1} parent=87 // pred_region
          %s2985 = sand.u32 %s364, 1
          %s2986 = scalar_lea.sflag [#allocation3], %s2985
          %s2987 = sand.u32 %s364, 1
          %s2988 = smul.addr %s2987, 24
          %s2989 = scalar_lea.vmem [#allocation2], %s2988
          %2990 = dma.done %s2986, 384
        $region96: #{autoencoder_forward.1} parent=87 // pred_fallthru
          _
      $region88: #{autoencoder_forward.1} parent=5 // pred_fallthru
        _
    $region6: #{autoencoder_forward.1} parent=1 // loop_footer
      %s29 = sadd.s32 1, %s25
    $region7: #{autoencoder_forward.1} parent=1 // loop_footer_branch
      %24 = sbr.rel target = $region3
    $region8: #{autoencoder_forward.1} parent=1 // loop_exit
      _
    %2991 = vsyncpa [#allocation3], 1
    %s2992 = scalar_lea.sflag [#allocation3], 1
    %2993 = vsyncpa %s2992, 1

</llo_original>
